<compile_context>
chip_gen: v6e
topology: v6e:2x2x1
jax: 0.10.0
libtpu: 0.0.40
codegen_flags: <defaults>
</compile_context>

<pallas_src>
import math
from functools import partial

import jax
import jax.numpy as jnp
from jax import lax
from jax.experimental import pallas as pl
from jax.experimental.pallas import tpu as pltpu


# ----------------------------- in-kernel helpers -----------------------------

def _layernorm(x, w, b, eps=1e-5):
    # PyTorch LayerNorm: biased variance, eps inside sqrt, per-channel affine.
    # Single pass: mean and mean-of-squares computed together.
    mu = jnp.mean(x, axis=-1, keepdims=True)
    ms = jnp.mean(x * x, axis=-1, keepdims=True)
    var = ms - mu * mu
    return (x - mu) * lax.rsqrt(var + eps) * w + b


def _gelu(x, approx):
    if approx:
        # tanh-approx GELU routes through the EUP slot (frees VALU); breaks
        # strict parity with nn.GELU() default, hence gated behind a flag.
        c = math.sqrt(2.0 / math.pi)
        return 0.5 * x * (1.0 + jnp.tanh(c * (x + 0.044715 * x * x * x)))
    return 0.5 * x * (1.0 + lax.erf(x * (1.0 / math.sqrt(2.0))))


# --------------------------------- kernel ------------------------------------

def tsr_block_kernel(x_ref,
                     ln1_w_ref, ln1_b_ref,
                     wqkv_ref,
                     wo_ref, bo_ref,
                     ln2_w_ref, ln2_b_ref,
                     w1_ref, b1_ref,
                     w2_ref, b2_ref,
                     o_ref,
                     ctx_ref,
                     *, num_heads, n_valid, mlp_chunk, compute_dtype,
                     approx_gelu):
    TB, Np, C = x_ref.shape
    hd = C // num_heads
    rows = TB * Np

    # residual stream kept in f32; rows is a multiple of 8 (wrapper pads N)
    x = x_ref[...].astype(jnp.float32).reshape(rows, C)              # (rows, C)

    # ---- attention branch ----
    xn = _layernorm(x, ln1_w_ref[...], ln1_b_ref[...])               # f32

    # fused QKV: one MXU pass with f32 accumulation; cast to compute_dtype
    # immediately so the (rows, 3C) f32 accumulator is never live afterwards.
    qkv = jnp.dot(xn.astype(compute_dtype), wqkv_ref[...],
                  preferred_element_type=jnp.float32).astype(compute_dtype)

    q = qkv[:, :C]            # softmax scale pre-folded into the Q weight cols
    k = qkv[:, C:2 * C]
    v = qkv[:, 2 * C:]

    mask_needed = n_valid < Np
    if mask_needed:
        key_mask = lax.broadcasted_iota(jnp.int32, (1, 1, Np), 2) < n_valid

    # Per-head attention (static, small head count), batched over the TB batch
    # elements with 3-D einsums. Per-head context is written into a (rows, C)
    # VMEM scratch so the output projection is ONE K=C matmul afterwards.
    for h in range(num_heads):
        sl = slice(h * hd, (h + 1) * hd)
        qh = q[:, sl].reshape(TB, Np, hd)
        kh = k[:, sl].reshape(TB, Np, hd)
        vh = v[:, sl].reshape(TB, Np, hd)
        s = jnp.einsum('bqd,bkd->bqk', qh, kh,
                       preferred_element_type=jnp.float32)           # (TB,Np,Np)
        if mask_needed:
            s = jnp.where(key_mask, s, -1e30)                        # pad keys
        m = jnp.max(s, axis=-1, keepdims=True)
        e = jnp.exp(s - m)                                           # f32 softmax
        p = e * pl.reciprocal(jnp.sum(e, axis=-1, keepdims=True), approx=True)
        ctx_h = jnp.einsum('bqk,bkd->bqd', p.astype(compute_dtype), vh,
                           preferred_element_type=jnp.float32)       # (TB,Np,hd)
        ctx_ref[:, sl] = ctx_h.reshape(rows, hd).astype(compute_dtype)

    # single lane-dense output projection, K = C
    attn_out = jnp.dot(ctx_ref[...], wo_ref[...],
                       preferred_element_type=jnp.float32)           # (rows, C)

    x1 = x + attn_out + bo_ref[...]                                  # residual 1

    # ---- MLP branch (hidden dimension processed in static chunks) ----
    xn2 = _layernorm(x1, ln2_w_ref[...], ln2_b_ref[...]).astype(compute_dtype)
    H = w1_ref.shape[1]
    mlp = jnp.zeros((rows, C), jnp.float32)
    for c0 in range(0, H, mlp_chunk):
        c1 = c0 + mlp_chunk
        hmid = jnp.dot(xn2, w1_ref[:, c0:c1],
                       preferred_element_type=jnp.float32) + b1_ref[:, c0:c1]
        hmid = _gelu(hmid, approx_gelu).astype(compute_dtype)        # f32 GELU
        mlp = mlp + jnp.dot(hmid, w2_ref[c0:c1, :],
                            preferred_element_type=jnp.float32)

    out = x1 + mlp + b2_ref[...]                                     # residual 2
    o_ref[...] = out.reshape(TB, Np, C).astype(o_ref.dtype)


# --------------------------------- wrapper -----------------------------------

def _pick_mlp_chunk(H, target=512):
    """Largest divisor of H that is <= target, preferring multiples of 128."""
    if H <= target:
        return H
    start = target - (target % 128)
    for c in range(start, 0, -128):
        if H % c == 0:
            return c
    for c in range(target, 0, -1):
        if H % c == 0:
            return c
    return H


def _vmem_limit_bytes():
    # ~72% of physical VMEM: ~46 MiB on v7x (64 MiB/TC), ~92 MiB on v5e/v6e
    # (128 MiB). Falls back to a conservative 48 MiB if the query fails.
    try:
        return int(0.72 * pltpu.get_tpu_info().vmem_capacity_bytes)
    except Exception:
        return 48 * 1024 * 1024


def tsr_block(x, params, num_heads, *, compute_dtype=jnp.bfloat16, tb=None,
              approx_gelu=False, single_buffer_weights=False):
    B, N, C = x.shape
    H = params["w1"].shape[1]
    assert C % num_heads == 0
    hd = C // num_heads
    scale = hd ** (-0.5)

    # Pad the token dim to a multiple of 8 sublanes so the (TB*N, C) flatten in
    # the kernel is tile-aligned; padded key rows are masked inside the kernel,
    # padded query rows are sliced off the output.
    Np = ((N + 7) // 8) * 8
    x_in = x if Np == N else jnp.pad(x, ((0, 0), (0, Np - N), (0, 0)))

    # Batch tile: amortize per-step overhead, but keep >= 2 parallel grid steps
    # whenever B >= 2 so both v7x TensorCores get work.
    if tb is None:
        rows_cap = 1024
        min_steps = 2 if B >= 2 else 1
        cands = [d for d in range(1, B + 1)
                 if B % d == 0 and d * Np <= rows_cap and B // d >= min_steps]
        tb = max(cands) if cands else 1
    assert B % tb == 0

    mlp_chunk = _pick_mlp_chunk(H)

    # Parameter prep (outside the hot kernel): fuse QKV weights, fold the
    # softmax scale into the Q columns, cast MXU weight operands to the compute
    # dtype (bf16 halves weight DMA/VMEM). LN/bias params stay f32 (VPU math).
    wqkv = jnp.concatenate([params["wq"] * scale, params["wk"], params["wv"]],
                           axis=1).astype(compute_dtype)             # (C, 3C)
    wo = params["wo"].astype(compute_dtype)
    w1 = params["w1"].astype(compute_dtype)
    w2 = params["w2"].astype(compute_dtype)

    def full(shape):
        idx = lambda b: (0,) * len(shape)
        if single_buffer_weights:
            # v7x VMEM-fit knob: single-buffer grid-invariant weights.
            return pl.BlockSpec(shape, idx, pipeline_mode=pl.Buffered(1))
        return pl.BlockSpec(shape, idx)

    in_specs = [
        pl.BlockSpec((tb, Np, C), lambda b: (b, 0, 0)),   # x
        full((1, C)), full((1, C)),                       # ln1 w, b
        full((C, 3 * C)),                                 # fused wqkv
        full((C, C)), full((1, C)),                       # wo, bo
        full((1, C)), full((1, C)),                       # ln2 w, b
        full((C, H)), full((1, H)),                       # fc1
        full((H, C)), full((1, C)),                       # fc2
    ]

    # advisory cost estimate for XLA's scheduler
    flops = (2 * B * Np * C * (3 * C)                 # fused qkv projection
             + 2 * 2 * B * num_heads * Np * Np * hd   # scores + context
             + 2 * B * Np * C * C                     # output projection
             + 2 * 2 * B * Np * C * H)                # fc1 + fc2
    transc = (B * num_heads * Np * Np + B * Np * H
              + B * num_heads * Np + 4 * B * Np)
    itemsize = jnp.dtype(x.dtype).itemsize
    param_bytes = sum(int(v.size) * jnp.dtype(v.dtype).itemsize
                      for v in (wqkv, wo, w1, w2,
                                params["ln1_w"], params["ln1_b"], params["bo"],
                                params["ln2_w"], params["ln2_b"],
                                params["b1"], params["b2"]))
    bytes_acc = 2 * B * Np * C * itemsize + param_bytes

    out = pl.pallas_call(
        partial(tsr_block_kernel, num_heads=num_heads, n_valid=N,
                mlp_chunk=mlp_chunk, compute_dtype=compute_dtype,
                approx_gelu=approx_gelu),
        out_shape=jax.ShapeDtypeStruct((B, Np, C), x.dtype),
        grid=(B // tb,),
        in_specs=in_specs,
        out_specs=pl.BlockSpec((tb, Np, C), lambda b: (b, 0, 0)),
        scratch_shapes=[pltpu.VMEM((tb * Np, C), compute_dtype)],  # per-head ctx
        compiler_params=pltpu.CompilerParams(
            dimension_semantics=("parallel",),
            vmem_limit_bytes=_vmem_limit_bytes()),
        cost_estimate=pl.CostEstimate(flops=int(flops),
                                      transcendentals=int(transc),
                                      bytes_accessed=int(bytes_acc)),
    )(x_in,
      params["ln1_w"], params["ln1_b"],
      wqkv,
      wo, params["bo"],
      params["ln2_w"], params["ln2_b"],
      w1, params["b1"],
      w2, params["b2"])

    return out if Np == N else out[:, :N, :]


# ------------------------------ pure-JAX reference ----------------------------

def tsr_block_ref(x, params, num_heads):
    B, N, C = x.shape
    hd = C // num_heads
    scale = hd ** (-0.5)

    def ln(x, w, b):
        mu = jnp.mean(x, -1, keepdims=True)
        var = jnp.mean((x - mu) ** 2, -1, keepdims=True)
        return (x - mu) * lax.rsqrt(var + 1e-5) * w + b

    xn = ln(x, params["ln1_w"], params["ln1_b"])
    q = (xn @ params["wq"]).reshape(B, N, num_heads, hd).transpose(0, 2, 1, 3)
    k = (xn @ params["wk"]).reshape(B, N, num_heads, hd).transpose(0, 2, 1, 3)
    v = (xn @ params["wv"]).reshape(B, N, num_heads, hd).transpose(0, 2, 1, 3)
    attn = jax.nn.softmax(jnp.einsum("bhqd,bhkd->bhqk", q, k) * scale, -1)
    ao = jnp.einsum("bhqk,bhkd->bhqd", attn, v).transpose(0, 2, 1, 3).reshape(B, N, C)
    x1 = x + (ao @ params["wo"] + params["bo"])
    xn2 = ln(x1, params["ln2_w"], params["ln2_b"])
    h = _gelu(xn2 @ params["w1"] + params["b1"], False)
    return x1 + (h @ params["w2"] + params["b2"])


# ----------------------------------- main -------------------------------------

if __name__ == "__main__":
    B, N, C = 2, 8, 32
    num_heads = 4
    mlp_ratio = 4.0
    H = int(C * mlp_ratio)

    key = jax.random.PRNGKey(0)
    ks = jax.random.split(key, 16)

    def rnd(k, shape, s=0.1):
        return jax.random.normal(k, shape, jnp.float32) * s

    params = {
        "ln1_w": 1.0 + rnd(ks[0], (1, C)),
        "ln1_b": rnd(ks[1], (1, C)),
        "wq": rnd(ks[2], (C, C)),
        "wk": rnd(ks[3], (C, C)),
        "wv": rnd(ks[4], (C, C)),
        "wo": rnd(ks[5], (C, C)),
        "bo": rnd(ks[6], (1, C)),
        "ln2_w": 1.0 + rnd(ks[7], (1, C)),
        "ln2_b": rnd(ks[8], (1, C)),
        "w1": rnd(ks[9], (C, H)),
        "b1": rnd(ks[10], (1, H)),
        "w2": rnd(ks[11], (H, C)),
        "b2": rnd(ks[12], (1, C)),
    }

    x = jax.random.normal(ks[13], (B, N, C), jnp.float32)
    ref = tsr_block_ref(x, params, num_heads)

    # default bf16 MXU-operand fast path (f32 accumulation / LN / softmax / GELU)
    out = jax.block_until_ready(tsr_block(x, params, num_heads))
    assert out.shape == (B, N, C)
    assert jnp.allclose(out, ref, atol=5e-2, rtol=5e-2), "bf16 mismatch vs reference"

    # f32-operand parity path (approx-reciprocal softmax is the only real delta)
    out_f32 = jax.block_until_ready(
        tsr_block(x, params, num_heads, compute_dtype=jnp.float32))
    assert jnp.allclose(out_f32, ref, atol=1e-2, rtol=1e-2), "f32 mismatch vs reference"

    # non-multiple-of-8 sequence length exercises the pad + key-mask path
    N2 = 11
    x2 = jax.random.normal(ks[14], (B, N2, C), jnp.float32)
    ref2 = tsr_block_ref(x2, params, num_heads)
    out2 = jax.block_until_ready(tsr_block(x2, params, num_heads))
    assert out2.shape == (B, N2, C)
    assert jnp.allclose(out2, ref2, atol=5e-2, rtol=5e-2), "padded-N mismatch vs reference"

    print("KERNEL_OK")
</pallas_src>

<mosaic_0001>
module attributes {stable_mosaic.version = 11 : i64} {
  func.func @tsr_block_kernel(%arg0: i32, %arg1: memref<1x8x32xf32, #tpu.memory_space<vmem>>, %arg2: memref<1x32xf32, #tpu.memory_space<vmem>>, %arg3: memref<1x32xf32, #tpu.memory_space<vmem>>, %arg4: memref<32x96xbf16, #tpu.memory_space<vmem>>, %arg5: memref<32x32xbf16, #tpu.memory_space<vmem>>, %arg6: memref<1x32xf32, #tpu.memory_space<vmem>>, %arg7: memref<1x32xf32, #tpu.memory_space<vmem>>, %arg8: memref<1x32xf32, #tpu.memory_space<vmem>>, %arg9: memref<32x128xbf16, #tpu.memory_space<vmem>>, %arg10: memref<1x128xf32, #tpu.memory_space<vmem>>, %arg11: memref<128x32xbf16, #tpu.memory_space<vmem>>, %arg12: memref<1x32xf32, #tpu.memory_space<vmem>>, %arg13: memref<1x8x32xf32, #tpu.memory_space<vmem>>, %arg14: memref<8x32xbf16, #tpu.memory_space<vmem>>) attributes {dimension_semantics = [#tpu.dimension_semantics<parallel>], iteration_bounds = array<i64: 2>, scalar_prefetch = 0 : i64, scratch_operands = 1 : i64, tpu.core_type = #tpu.core_type<tc>, window_params = [{transform_indices = @transform_0, window_bounds = array<i64: 1, 8, 32>}, {pipeline_mode = #tpu.pipeline_mode<synchronous>, transform_indices = @transform_1, window_bounds = array<i64: 1, 32>}, {pipeline_mode = #tpu.pipeline_mode<synchronous>, transform_indices = @transform_2, window_bounds = array<i64: 1, 32>}, {pipeline_mode = #tpu.pipeline_mode<synchronous>, transform_indices = @transform_3, window_bounds = array<i64: 32, 96>}, {pipeline_mode = #tpu.pipeline_mode<synchronous>, transform_indices = @transform_4, window_bounds = array<i64: 32, 32>}, {pipeline_mode = #tpu.pipeline_mode<synchronous>, transform_indices = @transform_5, window_bounds = array<i64: 1, 32>}, {pipeline_mode = #tpu.pipeline_mode<synchronous>, transform_indices = @transform_6, window_bounds = array<i64: 1, 32>}, {pipeline_mode = #tpu.pipeline_mode<synchronous>, transform_indices = @transform_7, window_bounds = array<i64: 1, 32>}, {pipeline_mode = #tpu.pipeline_mode<synchronous>, transform_indices = @transform_8, window_bounds = array<i64: 32, 128>}, {pipeline_mode = #tpu.pipeline_mode<synchronous>, transform_indices = @transform_9, window_bounds = array<i64: 1, 128>}, {pipeline_mode = #tpu.pipeline_mode<synchronous>, transform_indices = @transform_10, window_bounds = array<i64: 128, 32>}, {pipeline_mode = #tpu.pipeline_mode<synchronous>, transform_indices = @transform_11, window_bounds = array<i64: 1, 32>}, {transform_indices = @transform_12, window_bounds = array<i64: 1, 8, 32>}]} {
    %c0 = arith.constant 0 : index
    %c0_0 = arith.constant 0 : index
    %c0_1 = arith.constant 0 : index
    %0 = vector.load %arg1[%c0, %c0_0, %c0_1] : memref<1x8x32xf32, #tpu.memory_space<vmem>>, vector<1x8x32xf32>
    %1 = vector.shape_cast %0 : vector<1x8x32xf32> to vector<8x32xf32>
    %c0_2 = arith.constant 0 : index
    %c0_3 = arith.constant 0 : index
    %2 = vector.load %arg2[%c0_2, %c0_3] : memref<1x32xf32, #tpu.memory_space<vmem>>, vector<1x32xf32>
    %c0_4 = arith.constant 0 : index
    %c0_5 = arith.constant 0 : index
    %3 = vector.load %arg3[%c0_4, %c0_5] : memref<1x32xf32, #tpu.memory_space<vmem>>, vector<1x32xf32>
    %cst = arith.constant dense<0.000000e+00> : vector<8xf32>
    %4 = vector.multi_reduction <add>, %1, %cst [1] : vector<8x32xf32> to vector<8xf32>
    %5 = vector.shape_cast %4 : vector<8xf32> to vector<8x1xf32>
    %cst_6 = arith.constant 3.200000e+01 : f32
    %6 = vector.broadcast %cst_6 : f32 to vector<8x1xf32>
    %7 = arith.divf %5, %6 : vector<8x1xf32>
    %8 = arith.mulf %1, %1 : vector<8x32xf32>
    %cst_7 = arith.constant dense<0.000000e+00> : vector<8xf32>
    %9 = vector.multi_reduction <add>, %8, %cst_7 [1] : vector<8x32xf32> to vector<8xf32>
    %10 = vector.shape_cast %9 : vector<8xf32> to vector<8x1xf32>
    %cst_8 = arith.constant 3.200000e+01 : f32
    %11 = vector.broadcast %cst_8 : f32 to vector<8x1xf32>
    %12 = arith.divf %10, %11 : vector<8x1xf32>
    %13 = arith.mulf %7, %7 : vector<8x1xf32>
    %14 = arith.subf %12, %13 : vector<8x1xf32>
    %15 = vector.broadcast %7 : vector<8x1xf32> to vector<8x32xf32>
    %16 = arith.subf %1, %15 : vector<8x32xf32>
    %cst_9 = arith.constant 9.99999974E-6 : f32
    %17 = vector.broadcast %cst_9 : f32 to vector<8x1xf32>
    %18 = arith.addf %14, %17 : vector<8x1xf32>
    %19 = math.rsqrt %18 : vector<8x1xf32>
    %20 = vector.broadcast %19 : vector<8x1xf32> to vector<8x32xf32>
    %21 = arith.mulf %16, %20 : vector<8x32xf32>
    %22 = vector.broadcast %2 : vector<1x32xf32> to vector<8x32xf32>
    %23 = arith.mulf %21, %22 : vector<8x32xf32>
    %24 = vector.broadcast %3 : vector<1x32xf32> to vector<8x32xf32>
    %25 = arith.addf %23, %24 : vector<8x32xf32>
    %26 = arith.truncf %25 : vector<8x32xf32> to vector<8x32xbf16>
    %c0_10 = arith.constant 0 : index
    %c0_11 = arith.constant 0 : index
    %27 = vector.load %arg4[%c0_10, %c0_11] : memref<32x96xbf16, #tpu.memory_space<vmem>>, vector<32x96xbf16>
    %cst_12 = arith.constant dense<0.000000e+00> : vector<8x96xf32>
    %28 = tpu.matmul %26, %27, %cst_12 {dimension_numbers = #tpu.dot_dimension_numbers<[1], [0], [0], [1], [0, 0, 1, 1], [], []>} : vector<8x32xbf16>, vector<32x96xbf16>, vector<8x96xf32> -> vector<8x96xf32>
    %29 = arith.truncf %28 : vector<8x96xf32> to vector<8x96xbf16>
    %30 = vector.extract_strided_slice %29 {offsets = [0, 0], sizes = [8, 32], strides = [1, 1]} : vector<8x96xbf16> to vector<8x32xbf16>
    %31 = vector.extract_strided_slice %29 {offsets = [0, 32], sizes = [8, 32], strides = [1, 1]} : vector<8x96xbf16> to vector<8x32xbf16>
    %32 = vector.extract_strided_slice %29 {offsets = [0, 64], sizes = [8, 32], strides = [1, 1]} : vector<8x96xbf16> to vector<8x32xbf16>
    %33 = vector.extract_strided_slice %30 {offsets = [0, 0], sizes = [8, 8], strides = [1, 1]} : vector<8x32xbf16> to vector<8x8xbf16>
    %34 = vector.shape_cast %33 : vector<8x8xbf16> to vector<1x8x8xbf16>
    %35 = vector.extract_strided_slice %31 {offsets = [0, 0], sizes = [8, 8], strides = [1, 1]} : vector<8x32xbf16> to vector<8x8xbf16>
    %36 = vector.shape_cast %35 : vector<8x8xbf16> to vector<1x8x8xbf16>
    %37 = vector.extract_strided_slice %32 {offsets = [0, 0], sizes = [8, 8], strides = [1, 1]} : vector<8x32xbf16> to vector<8x8xbf16>
    %38 = vector.shape_cast %37 : vector<8x8xbf16> to vector<1x8x8xbf16>
    "tpu.trace_start"() <{level = 10 : i32, message = "bqd,bkd->bqk"}> : () -> ()
    %cst_13 = arith.constant dense<0.000000e+00> : vector<1x8x8xf32>
    %39 = tpu.matmul %34, %36, %cst_13 {dimension_numbers = #tpu.dot_dimension_numbers<[2], [2], [1], [1], [0, 0, 0, 1, 1, 1], [0], [0]>} : vector<1x8x8xbf16>, vector<1x8x8xbf16>, vector<1x8x8xf32> -> vector<1x8x8xf32>
    "tpu.trace_stop"() : () -> ()
    %cst_14 = arith.constant dense<0xFF800000> : vector<1x8xf32>
    %40 = vector.multi_reduction <maximumf>, %39, %cst_14 [2] : vector<1x8x8xf32> to vector<1x8xf32>
    %41 = vector.shape_cast %40 : vector<1x8xf32> to vector<1x8x1xf32>
    %42 = vector.broadcast %41 : vector<1x8x1xf32> to vector<1x8x8xf32>
    %43 = arith.subf %39, %42 : vector<1x8x8xf32>
    %44 = math.exp %43 : vector<1x8x8xf32>
    %cst_15 = arith.constant dense<0.000000e+00> : vector<1x8xf32>
    %45 = vector.multi_reduction <add>, %44, %cst_15 [2] : vector<1x8x8xf32> to vector<1x8xf32>
    %46 = vector.shape_cast %45 : vector<1x8xf32> to vector<1x8x1xf32>
    %47 = tpu.reciprocal %46 {approx = true} : vector<1x8x1xf32> -> vector<1x8x1xf32>
    %48 = vector.broadcast %47 : vector<1x8x1xf32> to vector<1x8x8xf32>
    %49 = arith.mulf %44, %48 : vector<1x8x8xf32>
    %50 = arith.truncf %49 : vector<1x8x8xf32> to vector<1x8x8xbf16>
    "tpu.trace_start"() <{level = 10 : i32, message = "bqk,bkd->bqd"}> : () -> ()
    %cst_16 = arith.constant dense<0.000000e+00> : vector<1x8x8xf32>
    %51 = tpu.matmul %50, %38, %cst_16 {dimension_numbers = #tpu.dot_dimension_numbers<[2], [1], [1], [2], [0, 0, 0, 1, 1, 2], [0], [0]>} : vector<1x8x8xbf16>, vector<1x8x8xbf16>, vector<1x8x8xf32> -> vector<1x8x8xf32>
    "tpu.trace_stop"() : () -> ()
    %52 = vector.shape_cast %51 : vector<1x8x8xf32> to vector<8x8xf32>
    %53 = arith.truncf %52 : vector<8x8xf32> to vector<8x8xbf16>
    %c0_17 = arith.constant 0 : index
    %c0_18 = arith.constant 0 : index
    %54 = vector.load %arg14[%c0_17, %c0_18] : memref<8x32xbf16, #tpu.memory_space<vmem>>, vector<8x8xbf16>
    tpu.vector_store %arg14[%c0_17, %c0_18], %53 {strides = array<i32>} : memref<8x32xbf16, #tpu.memory_space<vmem>>, vector<8x8xbf16>,
    %55 = vector.extract_strided_slice %30 {offsets = [0, 8], sizes = [8, 8], strides = [1, 1]} : vector<8x32xbf16> to vector<8x8xbf16>
    %56 = vector.shape_cast %55 : vector<8x8xbf16> to vector<1x8x8xbf16>
    %57 = vector.extract_strided_slice %31 {offsets = [0, 8], sizes = [8, 8], strides = [1, 1]} : vector<8x32xbf16> to vector<8x8xbf16>
    %58 = vector.shape_cast %57 : vector<8x8xbf16> to vector<1x8x8xbf16>
    %59 = vector.extract_strided_slice %32 {offsets = [0, 8], sizes = [8, 8], strides = [1, 1]} : vector<8x32xbf16> to vector<8x8xbf16>
    %60 = vector.shape_cast %59 : vector<8x8xbf16> to vector<1x8x8xbf16>
    "tpu.trace_start"() <{level = 10 : i32, message = "bqd,bkd->bqk"}> : () -> ()
    %cst_19 = arith.constant dense<0.000000e+00> : vector<1x8x8xf32>
    %61 = tpu.matmul %56, %58, %cst_19 {dimension_numbers = #tpu.dot_dimension_numbers<[2], [2], [1], [1], [0, 0, 0, 1, 1, 1], [0], [0]>} : vector<1x8x8xbf16>, vector<1x8x8xbf16>, vector<1x8x8xf32> -> vector<1x8x8xf32>
    "tpu.trace_stop"() : () -> ()
    %cst_20 = arith.constant dense<0xFF800000> : vector<1x8xf32>
    %62 = vector.multi_reduction <maximumf>, %61, %cst_20 [2] : vector<1x8x8xf32> to vector<1x8xf32>
    %63 = vector.shape_cast %62 : vector<1x8xf32> to vector<1x8x1xf32>
    %64 = vector.broadcast %63 : vector<1x8x1xf32> to vector<1x8x8xf32>
    %65 = arith.subf %61, %64 : vector<1x8x8xf32>
    %66 = math.exp %65 : vector<1x8x8xf32>
    %cst_21 = arith.constant dense<0.000000e+00> : vector<1x8xf32>
    %67 = vector.multi_reduction <add>, %66, %cst_21 [2] : vector<1x8x8xf32> to vector<1x8xf32>
    %68 = vector.shape_cast %67 : vector<1x8xf32> to vector<1x8x1xf32>
    %69 = tpu.reciprocal %68 {approx = true} : vector<1x8x1xf32> -> vector<1x8x1xf32>
    %70 = vector.broadcast %69 : vector<1x8x1xf32> to vector<1x8x8xf32>
    %71 = arith.mulf %66, %70 : vector<1x8x8xf32>
    %72 = arith.truncf %71 : vector<1x8x8xf32> to vector<1x8x8xbf16>
    "tpu.trace_start"() <{level = 10 : i32, message = "bqk,bkd->bqd"}> : () -> ()
    %cst_22 = arith.constant dense<0.000000e+00> : vector<1x8x8xf32>
    %73 = tpu.matmul %72, %60, %cst_22 {dimension_numbers = #tpu.dot_dimension_numbers<[2], [1], [1], [2], [0, 0, 0, 1, 1, 2], [0], [0]>} : vector<1x8x8xbf16>, vector<1x8x8xbf16>, vector<1x8x8xf32> -> vector<1x8x8xf32>
    "tpu.trace_stop"() : () -> ()
    %74 = vector.shape_cast %73 : vector<1x8x8xf32> to vector<8x8xf32>
    %75 = arith.truncf %74 : vector<8x8xf32> to vector<8x8xbf16>
    %c0_23 = arith.constant 0 : index
    %c8 = arith.constant 8 : index
    %76 = vector.load %arg14[%c0_23, %c8] : memref<8x32xbf16, #tpu.memory_space<vmem>>, vector<8x8xbf16>
    tpu.vector_store %arg14[%c0_23, %c8], %75 {strides = array<i32>} : memref<8x32xbf16, #tpu.memory_space<vmem>>, vector<8x8xbf16>,
    %77 = vector.extract_strided_slice %30 {offsets = [0, 16], sizes = [8, 8], strides = [1, 1]} : vector<8x32xbf16> to vector<8x8xbf16>
    %78 = vector.shape_cast %77 : vector<8x8xbf16> to vector<1x8x8xbf16>
    %79 = vector.extract_strided_slice %31 {offsets = [0, 16], sizes = [8, 8], strides = [1, 1]} : vector<8x32xbf16> to vector<8x8xbf16>
    %80 = vector.shape_cast %79 : vector<8x8xbf16> to vector<1x8x8xbf16>
    %81 = vector.extract_strided_slice %32 {offsets = [0, 16], sizes = [8, 8], strides = [1, 1]} : vector<8x32xbf16> to vector<8x8xbf16>
    %82 = vector.shape_cast %81 : vector<8x8xbf16> to vector<1x8x8xbf16>
    "tpu.trace_start"() <{level = 10 : i32, message = "bqd,bkd->bqk"}> : () -> ()
    %cst_24 = arith.constant dense<0.000000e+00> : vector<1x8x8xf32>
    %83 = tpu.matmul %78, %80, %cst_24 {dimension_numbers = #tpu.dot_dimension_numbers<[2], [2], [1], [1], [0, 0, 0, 1, 1, 1], [0], [0]>} : vector<1x8x8xbf16>, vector<1x8x8xbf16>, vector<1x8x8xf32> -> vector<1x8x8xf32>
    "tpu.trace_stop"() : () -> ()
    %cst_25 = arith.constant dense<0xFF800000> : vector<1x8xf32>
    %84 = vector.multi_reduction <maximumf>, %83, %cst_25 [2] : vector<1x8x8xf32> to vector<1x8xf32>
    %85 = vector.shape_cast %84 : vector<1x8xf32> to vector<1x8x1xf32>
    %86 = vector.broadcast %85 : vector<1x8x1xf32> to vector<1x8x8xf32>
    %87 = arith.subf %83, %86 : vector<1x8x8xf32>
    %88 = math.exp %87 : vector<1x8x8xf32>
    %cst_26 = arith.constant dense<0.000000e+00> : vector<1x8xf32>
    %89 = vector.multi_reduction <add>, %88, %cst_26 [2] : vector<1x8x8xf32> to vector<1x8xf32>
    %90 = vector.shape_cast %89 : vector<1x8xf32> to vector<1x8x1xf32>
    %91 = tpu.reciprocal %90 {approx = true} : vector<1x8x1xf32> -> vector<1x8x1xf32>
    %92 = vector.broadcast %91 : vector<1x8x1xf32> to vector<1x8x8xf32>
    %93 = arith.mulf %88, %92 : vector<1x8x8xf32>
    %94 = arith.truncf %93 : vector<1x8x8xf32> to vector<1x8x8xbf16>
    "tpu.trace_start"() <{level = 10 : i32, message = "bqk,bkd->bqd"}> : () -> ()
    %cst_27 = arith.constant dense<0.000000e+00> : vector<1x8x8xf32>
    %95 = tpu.matmul %94, %82, %cst_27 {dimension_numbers = #tpu.dot_dimension_numbers<[2], [1], [1], [2], [0, 0, 0, 1, 1, 2], [0], [0]>} : vector<1x8x8xbf16>, vector<1x8x8xbf16>, vector<1x8x8xf32> -> vector<1x8x8xf32>
    "tpu.trace_stop"() : () -> ()
    %96 = vector.shape_cast %95 : vector<1x8x8xf32> to vector<8x8xf32>
    %97 = arith.truncf %96 : vector<8x8xf32> to vector<8x8xbf16>
    %c0_28 = arith.constant 0 : index
    %c16 = arith.constant 16 : index
    %98 = vector.load %arg14[%c0_28, %c16] : memref<8x32xbf16, #tpu.memory_space<vmem>>, vector<8x8xbf16>
    tpu.vector_store %arg14[%c0_28, %c16], %97 {strides = array<i32>} : memref<8x32xbf16, #tpu.memory_space<vmem>>, vector<8x8xbf16>,
    %99 = vector.extract_strided_slice %30 {offsets = [0, 24], sizes = [8, 8], strides = [1, 1]} : vector<8x32xbf16> to vector<8x8xbf16>
    %100 = vector.shape_cast %99 : vector<8x8xbf16> to vector<1x8x8xbf16>
    %101 = vector.extract_strided_slice %31 {offsets = [0, 24], sizes = [8, 8], strides = [1, 1]} : vector<8x32xbf16> to vector<8x8xbf16>
    %102 = vector.shape_cast %101 : vector<8x8xbf16> to vector<1x8x8xbf16>
    %103 = vector.extract_strided_slice %32 {offsets = [0, 24], sizes = [8, 8], strides = [1, 1]} : vector<8x32xbf16> to vector<8x8xbf16>
    %104 = vector.shape_cast %103 : vector<8x8xbf16> to vector<1x8x8xbf16>
    "tpu.trace_start"() <{level = 10 : i32, message = "bqd,bkd->bqk"}> : () -> ()
    %cst_29 = arith.constant dense<0.000000e+00> : vector<1x8x8xf32>
    %105 = tpu.matmul %100, %102, %cst_29 {dimension_numbers = #tpu.dot_dimension_numbers<[2], [2], [1], [1], [0, 0, 0, 1, 1, 1], [0], [0]>} : vector<1x8x8xbf16>, vector<1x8x8xbf16>, vector<1x8x8xf32> -> vector<1x8x8xf32>
    "tpu.trace_stop"() : () -> ()
    %cst_30 = arith.constant dense<0xFF800000> : vector<1x8xf32>
    %106 = vector.multi_reduction <maximumf>, %105, %cst_30 [2] : vector<1x8x8xf32> to vector<1x8xf32>
    %107 = vector.shape_cast %106 : vector<1x8xf32> to vector<1x8x1xf32>
    %108 = vector.broadcast %107 : vector<1x8x1xf32> to vector<1x8x8xf32>
    %109 = arith.subf %105, %108 : vector<1x8x8xf32>
    %110 = math.exp %109 : vector<1x8x8xf32>
    %cst_31 = arith.constant dense<0.000000e+00> : vector<1x8xf32>
    %111 = vector.multi_reduction <add>, %110, %cst_31 [2] : vector<1x8x8xf32> to vector<1x8xf32>
    %112 = vector.shape_cast %111 : vector<1x8xf32> to vector<1x8x1xf32>
    %113 = tpu.reciprocal %112 {approx = true} : vector<1x8x1xf32> -> vector<1x8x1xf32>
    %114 = vector.broadcast %113 : vector<1x8x1xf32> to vector<1x8x8xf32>
    %115 = arith.mulf %110, %114 : vector<1x8x8xf32>
    %116 = arith.truncf %115 : vector<1x8x8xf32> to vector<1x8x8xbf16>
    "tpu.trace_start"() <{level = 10 : i32, message = "bqk,bkd->bqd"}> : () -> ()
    %cst_32 = arith.constant dense<0.000000e+00> : vector<1x8x8xf32>
    %117 = tpu.matmul %116, %104, %cst_32 {dimension_numbers = #tpu.dot_dimension_numbers<[2], [1], [1], [2], [0, 0, 0, 1, 1, 2], [0], [0]>} : vector<1x8x8xbf16>, vector<1x8x8xbf16>, vector<1x8x8xf32> -> vector<1x8x8xf32>
    "tpu.trace_stop"() : () -> ()
    %118 = vector.shape_cast %117 : vector<1x8x8xf32> to vector<8x8xf32>
    %119 = arith.truncf %118 : vector<8x8xf32> to vector<8x8xbf16>
    %c0_33 = arith.constant 0 : index
    %c24 = arith.constant 24 : index
    %120 = vector.load %arg14[%c0_33, %c24] : memref<8x32xbf16, #tpu.memory_space<vmem>>, vector<8x8xbf16>
    tpu.vector_store %arg14[%c0_33, %c24], %119 {strides = array<i32>} : memref<8x32xbf16, #tpu.memory_space<vmem>>, vector<8x8xbf16>,
    %c0_34 = arith.constant 0 : index
    %c0_35 = arith.constant 0 : index
    %121 = vector.load %arg14[%c0_34, %c0_35] : memref<8x32xbf16, #tpu.memory_space<vmem>>, vector<8x32xbf16>
    %c0_36 = arith.constant 0 : index
    %c0_37 = arith.constant 0 : index
    %122 = vector.load %arg5[%c0_36, %c0_37] : memref<32x32xbf16, #tpu.memory_space<vmem>>, vector<32x32xbf16>
    %cst_38 = arith.constant dense<0.000000e+00> : vector<8x32xf32>
    %123 = tpu.matmul %121, %122, %cst_38 {dimension_numbers = #tpu.dot_dimension_numbers<[1], [0], [0], [1], [0, 0, 1, 1], [], []>} : vector<8x32xbf16>, vector<32x32xbf16>, vector<8x32xf32> -> vector<8x32xf32>
    %124 = arith.addf %1, %123 : vector<8x32xf32>
    %c0_39 = arith.constant 0 : index
    %c0_40 = arith.constant 0 : index
    %125 = vector.load %arg6[%c0_39, %c0_40] : memref<1x32xf32, #tpu.memory_space<vmem>>, vector<1x32xf32>
    %126 = vector.broadcast %125 : vector<1x32xf32> to vector<8x32xf32>
    %127 = arith.addf %124, %126 : vector<8x32xf32>
    %c0_41 = arith.constant 0 : index
    %c0_42 = arith.constant 0 : index
    %128 = vector.load %arg7[%c0_41, %c0_42] : memref<1x32xf32, #tpu.memory_space<vmem>>, vector<1x32xf32>
    %c0_43 = arith.constant 0 : index
    %c0_44 = arith.constant 0 : index
    %129 = vector.load %arg8[%c0_43, %c0_44] : memref<1x32xf32, #tpu.memory_space<vmem>>, vector<1x32xf32>
    %cst_45 = arith.constant dense<0.000000e+00> : vector<8xf32>
    %130 = vector.multi_reduction <add>, %127, %cst_45 [1] : vector<8x32xf32> to vector<8xf32>
    %131 = vector.shape_cast %130 : vector<8xf32> to vector<8x1xf32>
    %cst_46 = arith.constant 3.200000e+01 : f32
    %132 = vector.broadcast %cst_46 : f32 to vector<8x1xf32>
    %133 = arith.divf %131, %132 : vector<8x1xf32>
    %134 = arith.mulf %127, %127 : vector<8x32xf32>
    %cst_47 = arith.constant dense<0.000000e+00> : vector<8xf32>
    %135 = vector.multi_reduction <add>, %134, %cst_47 [1] : vector<8x32xf32> to vector<8xf32>
    %136 = vector.shape_cast %135 : vector<8xf32> to vector<8x1xf32>
    %cst_48 = arith.constant 3.200000e+01 : f32
    %137 = vector.broadcast %cst_48 : f32 to vector<8x1xf32>
    %138 = arith.divf %136, %137 : vector<8x1xf32>
    %139 = arith.mulf %133, %133 : vector<8x1xf32>
    %140 = arith.subf %138, %139 : vector<8x1xf32>
    %141 = vector.broadcast %133 : vector<8x1xf32> to vector<8x32xf32>
    %142 = arith.subf %127, %141 : vector<8x32xf32>
    %cst_49 = arith.constant 9.99999974E-6 : f32
    %143 = vector.broadcast %cst_49 : f32 to vector<8x1xf32>
    %144 = arith.addf %140, %143 : vector<8x1xf32>
    %145 = math.rsqrt %144 : vector<8x1xf32>
    %146 = vector.broadcast %145 : vector<8x1xf32> to vector<8x32xf32>
    %147 = arith.mulf %142, %146 : vector<8x32xf32>
    %148 = vector.broadcast %128 : vector<1x32xf32> to vector<8x32xf32>
    %149 = arith.mulf %147, %148 : vector<8x32xf32>
    %150 = vector.broadcast %129 : vector<1x32xf32> to vector<8x32xf32>
    %151 = arith.addf %149, %150 : vector<8x32xf32>
    %152 = arith.truncf %151 : vector<8x32xf32> to vector<8x32xbf16>
    %cst_50 = arith.constant 0.000000e+00 : f32
    %153 = vector.broadcast %cst_50 : f32 to vector<8x32xf32>
    %c0_51 = arith.constant 0 : index
    %c0_52 = arith.constant 0 : index
    %154 = vector.load %arg9[%c0_51, %c0_52] : memref<32x128xbf16, #tpu.memory_space<vmem>>, vector<32x128xbf16>
    %cst_53 = arith.constant dense<0.000000e+00> : vector<8x128xf32>
    %155 = tpu.matmul %152, %154, %cst_53 {dimension_numbers = #tpu.dot_dimension_numbers<[1], [0], [0], [1], [0, 0, 1, 1], [], []>} : vector<8x32xbf16>, vector<32x128xbf16>, vector<8x128xf32> -> vector<8x128xf32>
    %c0_54 = arith.constant 0 : index
    %c0_55 = arith.constant 0 : index
    %156 = vector.load %arg10[%c0_54, %c0_55] : memref<1x128xf32, #tpu.memory_space<vmem>>, vector<1x128xf32>
    %157 = vector.broadcast %156 : vector<1x128xf32> to vector<8x128xf32>
    %158 = arith.addf %155, %157 : vector<8x128xf32>
    %cst_56 = arith.constant 5.000000e-01 : f32
    %159 = vector.broadcast %cst_56 : f32 to vector<8x128xf32>
    %160 = arith.mulf %159, %158 : vector<8x128xf32>
    %cst_57 = arith.constant 0.707106769 : f32
    %161 = vector.broadcast %cst_57 : f32 to vector<8x128xf32>
    %162 = arith.mulf %158, %161 : vector<8x128xf32>
    %163 = math.erf %162 : vector<8x128xf32>
    %cst_58 = arith.constant 1.000000e+00 : f32
    %164 = vector.broadcast %cst_58 : f32 to vector<8x128xf32>
    %165 = arith.addf %164, %163 : vector<8x128xf32>
    %166 = arith.mulf %160, %165 : vector<8x128xf32>
    %167 = arith.truncf %166 : vector<8x128xf32> to vector<8x128xbf16>
    %c0_59 = arith.constant 0 : index
    %c0_60 = arith.constant 0 : index
    %168 = vector.load %arg11[%c0_59, %c0_60] : memref<128x32xbf16, #tpu.memory_space<vmem>>, vector<128x32xbf16>
    %cst_61 = arith.constant dense<0.000000e+00> : vector<8x32xf32>
    %169 = tpu.matmul %167, %168, %cst_61 {dimension_numbers = #tpu.dot_dimension_numbers<[1], [0], [0], [1], [0, 0, 1, 1], [], []>} : vector<8x128xbf16>, vector<128x32xbf16>, vector<8x32xf32> -> vector<8x32xf32>
    %170 = arith.addf %153, %169 : vector<8x32xf32>
    %171 = arith.addf %127, %170 : vector<8x32xf32>
    %c0_62 = arith.constant 0 : index
    %c0_63 = arith.constant 0 : index
    %172 = vector.load %arg12[%c0_62, %c0_63] : memref<1x32xf32, #tpu.memory_space<vmem>>, vector<1x32xf32>
    %173 = vector.broadcast %172 : vector<1x32xf32> to vector<8x32xf32>
    %174 = arith.addf %171, %173 : vector<8x32xf32>
    %175 = vector.shape_cast %174 : vector<8x32xf32> to vector<1x8x32xf32>
    %c0_64 = arith.constant 0 : index
    %c0_65 = arith.constant 0 : index
    %c0_66 = arith.constant 0 : index
    %176 = vector.load %arg13[%c0_64, %c0_65, %c0_66] : memref<1x8x32xf32, #tpu.memory_space<vmem>>, vector<1x8x32xf32>
    tpu.vector_store %arg13[%c0_64, %c0_65, %c0_66], %175 {strides = array<i32>} : memref<1x8x32xf32, #tpu.memory_space<vmem>>, vector<1x8x32xf32>,
    return
  }
  func.func @transform_0(%arg0: i32) -> (i32, i32, i32) {
    %c0_i32 = arith.constant 0 : i32
    %c0_i32_0 = arith.constant 0 : i32
    %c0_i32_1 = arith.constant 0 : i32
    return %arg0, %c0_i32, %c0_i32_0 : i32, i32, i32
  }
  func.func @transform_1(%arg0: i32) -> (i32, i32) {
    %c0_i32 = arith.constant 0 : i32
    %c0_i32_0 = arith.constant 0 : i32
    %c0_i32_1 = arith.constant 0 : i32
    return %c0_i32, %c0_i32_0 : i32, i32
  }
  func.func @transform_2(%arg0: i32) -> (i32, i32) {
    %c0_i32 = arith.constant 0 : i32
    %c0_i32_0 = arith.constant 0 : i32
    %c0_i32_1 = arith.constant 0 : i32
    return %c0_i32, %c0_i32_0 : i32, i32
  }
  func.func @transform_3(%arg0: i32) -> (i32, i32) {
    %c0_i32 = arith.constant 0 : i32
    %c0_i32_0 = arith.constant 0 : i32
    %c0_i32_1 = arith.constant 0 : i32
    return %c0_i32, %c0_i32_0 : i32, i32
  }
  func.func @transform_4(%arg0: i32) -> (i32, i32) {
    %c0_i32 = arith.constant 0 : i32
    %c0_i32_0 = arith.constant 0 : i32
    %c0_i32_1 = arith.constant 0 : i32
    return %c0_i32, %c0_i32_0 : i32, i32
  }
  func.func @transform_5(%arg0: i32) -> (i32, i32) {
    %c0_i32 = arith.constant 0 : i32
    %c0_i32_0 = arith.constant 0 : i32
    %c0_i32_1 = arith.constant 0 : i32
    return %c0_i32, %c0_i32_0 : i32, i32
  }
  func.func @transform_6(%arg0: i32) -> (i32, i32) {
    %c0_i32 = arith.constant 0 : i32
    %c0_i32_0 = arith.constant 0 : i32
    %c0_i32_1 = arith.constant 0 : i32
    return %c0_i32, %c0_i32_0 : i32, i32
  }
  func.func @transform_7(%arg0: i32) -> (i32, i32) {
    %c0_i32 = arith.constant 0 : i32
    %c0_i32_0 = arith.constant 0 : i32
    %c0_i32_1 = arith.constant 0 : i32
    return %c0_i32, %c0_i32_0 : i32, i32
  }
  func.func @transform_8(%arg0: i32) -> (i32, i32) {
    %c0_i32 = arith.constant 0 : i32
    %c0_i32_0 = arith.constant 0 : i32
    %c0_i32_1 = arith.constant 0 : i32
    return %c0_i32, %c0_i32_0 : i32, i32
  }
  func.func @transform_9(%arg0: i32) -> (i32, i32) {
    %c0_i32 = arith.constant 0 : i32
    %c0_i32_0 = arith.constant 0 : i32
    %c0_i32_1 = arith.constant 0 : i32
    return %c0_i32, %c0_i32_0 : i32, i32
  }
  func.func @transform_10(%arg0: i32) -> (i32, i32) {
    %c0_i32 = arith.constant 0 : i32
    %c0_i32_0 = arith.constant 0 : i32
    %c0_i32_1 = arith.constant 0 : i32
    return %c0_i32, %c0_i32_0 : i32, i32
  }
  func.func @transform_11(%arg0: i32) -> (i32, i32) {
    %c0_i32 = arith.constant 0 : i32
    %c0_i32_0 = arith.constant 0 : i32
    %c0_i32_1 = arith.constant 0 : i32
    return %c0_i32, %c0_i32_0 : i32, i32
  }
  func.func @transform_12(%arg0: i32) -> (i32, i32, i32) {
    %c0_i32 = arith.constant 0 : i32
    %c0_i32_0 = arith.constant 0 : i32
    %c0_i32_1 = arith.constant 0 : i32
    return %arg0, %c0_i32, %c0_i32_0 : i32, i32, i32
  }
}

</mosaic_0001>

<llo_original>
// kernel: tpu_custom_call.1
$region0: #{tpu_custom_call.1}
  #allocation0 [shape = 'u32[]', space=smem, size = 0x4, offset = 0x4, fixed_abs, tag = 'smem constant byte address 0x4 - core index']
  #allocation1 [shape = 'u32[144,128]{1,0:T(1,128)}', space=vmem, size = 0x12000, scoped, tag = 'internal scratch']
  #allocation2 [shape = 'bf16[8,32]{1,0:T(8,128)(2,1)}', space=vmem, size = 0x800, scoped, tag = 'scratch operand']
  %s0 = inlined_call_operand.vmem [shape: f32[2,8,32], index: 0, kind: input, shape index: {}]
  %s1 = inlined_call_operand.vmem [shape: f32[1,32], index: 1, kind: input, shape index: {}]
  %s2 = inlined_call_operand.vmem [shape: f32[1,32], index: 2, kind: input, shape index: {}]
  %s3 = inlined_call_operand.vmem [shape: bf16[32,96], index: 3, kind: input, shape index: {}]
  %s4 = inlined_call_operand.vmem [shape: bf16[32,32], index: 4, kind: input, shape index: {}]
  %s5 = inlined_call_operand.vmem [shape: f32[1,32], index: 5, kind: input, shape index: {}]
  %s6 = inlined_call_operand.vmem [shape: f32[1,32], index: 6, kind: input, shape index: {}]
  %s7 = inlined_call_operand.vmem [shape: f32[1,32], index: 7, kind: input, shape index: {}]
  %s8 = inlined_call_operand.vmem [shape: bf16[32,128], index: 8, kind: input, shape index: {}]
  %s9 = inlined_call_operand.vmem [shape: f32[1,128], index: 9, kind: input, shape index: {}]
  %s10 = inlined_call_operand.vmem [shape: bf16[128,32], index: 10, kind: input, shape index: {}]
  %s11 = inlined_call_operand.vmem [shape: f32[1,32], index: 11, kind: input, shape index: {}]
  %s12 = inlined_call_operand.hbm [shape: f32[2,8,32], index: 12, kind: output, shape index: {}]
  %s13 = sld [smem:[#allocation0]]
  $region81: #{tpu_custom_call.1} parent=0
    _
  %s15 = ssub.s32 1, %s13
  %s16 = scalar_select 0, %s15, %s13
  $region1: #{tpu_custom_call.1} parent=0
    #allocation3 [shape = 'u8[8192]{0}', space=vmem, size = 0x2000, scoped, tag = 'output window, operand 0']
    #allocation4 [shape = 's32[2]{0}', space=sflag, size = 0x8, scoped, tag = 'scoped memory for tpu_custom_call.1']
    %17 = vsyncpa [#allocation4], 0
    %s18 = scalar_lea.sflag [#allocation4], 1
    %19 = vsyncpa %s18, 0
    loop: start=0, step=1, limit=4
    $region2: #{tpu_custom_call.1} parent=1 // loop_pre_header
      _
    $region3: #{tpu_custom_call.1} parent=1 // loop_header
      %s21 = sphi 0, %s25
      %p22 = scmp.ge.s32.totalorder %s21, 4
      %s31 = sphi 0, %s33
      %s34 = sphi 0, %s31
      %s35 = sphi 0, %s34
      %s51 = sphi 0, %s35
      %s55 = sphi 0, %s55
      %s57 = sphi 0, %s55
      %s58 = sphi 0, %s57
      %s72 = sphi 0, %s58
      %s76 = sphi 0, %s76
      %s78 = sphi 0, %s76
      %s79 = sphi 0, %s78
      %s93 = sphi 0, %s79
      %s97 = sphi 0, %s97
      %s99 = sphi 0, %s97
      %s100 = sphi 0, %s99
      %s114 = sphi 0, %s100
      %s118 = sphi 0, %s118
      %s120 = sphi 0, %s118
      %s121 = sphi 0, %s120
      %s135 = sphi 0, %s121
      %s139 = sphi 0, %s139
      %s141 = sphi 0, %s139
      %s142 = sphi 0, %s141
      %s156 = sphi 0, %s142
      %s160 = sphi 0, %s160
      %s162 = sphi 0, %s160
      %s163 = sphi 0, %s162
      %s177 = sphi 0, %s163
      %s181 = sphi 0, %s181
      %s183 = sphi 0, %s181
      %s184 = sphi 0, %s183
      %s198 = sphi 0, %s184
      %s202 = sphi 0, %s202
      %s204 = sphi 0, %s202
      %s205 = sphi 0, %s204
      %s219 = sphi 0, %s205
      %s223 = sphi 0, %s223
      %s225 = sphi 0, %s223
      %s226 = sphi 0, %s225
      %s240 = sphi 0, %s226
      %s244 = sphi 0, %s244
      %s246 = sphi 0, %s244
      %s247 = sphi 0, %s246
      %s261 = sphi 0, %s247
      %s265 = sphi 0, %s265
      %s267 = sphi 0, %s265
      %s268 = sphi 0, %s267
      %s282 = sphi 0, %s268
      %s288 = sphi 0, %s290
      %s291 = sphi 0, %s288
      %s292 = sphi 0, %s291
      %s308 = sphi 0, %s292
    $region4: #{tpu_custom_call.1} parent=1 // loop_header_branch
      %24 = sbr.rel (%p22) target = $region8
    $region5: #{tpu_custom_call.1} parent=1 // loop_body
      %s26 = ssub.s32 %s21, 1
      %s27 = ssub.s32 %s21, 2
      %s28 = sadd.s32 %s21, 1
      %s29 = ssub.s32 %s21, %s28
      %p30 = scmp.eq.s32.totalorder %s29, 0
      %s32 = sadd.s32 %s31, 1
      %s33 = scalar_select %p30, %s31, %s32
      %p36 = pneg %p30
      %p37 = scmp.eq.s32.totalorder %s21, 1
      %p38 = por %p36, %p37
      %p39 = scmp.ne.s32.totalorder %s31, %s34
      %p40 = scmp.eq.s32.totalorder %s21, 0
      %p41 = por %p39, %p40
      %p42 = scmp.ne.s32.totalorder %s31, %s34
      %p43 = scmp.eq.s32.totalorder %s26, 1
      %p44 = por %p42, %p43
      %p45 = scmp.ne.s32.totalorder %s34, %s35
      %p46 = scmp.eq.s32.totalorder %s26, 0
      %p47 = por %p45, %p46
      %p48 = scmp.ne.s32.totalorder %s34, %s35
      %p49 = scmp.eq.s32.totalorder %s27, 1
      %p50 = por %p48, %p49
      %p52 = scmp.ne.s32.totalorder %s35, %s51
      %p53 = scmp.eq.s32.totalorder %s27, 0
      %p54 = por %p52, %p53
      %s56 = sadd.s32 %s55, 1
      %p59 = scmp.eq.s32.totalorder %s21, 1
      %p60 = scmp.ne.s32.totalorder %s55, %s57
      %p61 = scmp.eq.s32.totalorder %s21, 0
      %p62 = por %p60, %p61
      %p63 = scmp.ne.s32.totalorder %s55, %s57
      %p64 = scmp.eq.s32.totalorder %s26, 1
      %p65 = por %p63, %p64
      %p66 = scmp.ne.s32.totalorder %s57, %s58
      %p67 = scmp.eq.s32.totalorder %s26, 0
      %p68 = por %p66, %p67
      %p69 = scmp.ne.s32.totalorder %s57, %s58
      %p70 = scmp.eq.s32.totalorder %s27, 1
      %p71 = por %p69, %p70
      %p73 = scmp.ne.s32.totalorder %s58, %s72
      %p74 = scmp.eq.s32.totalorder %s27, 0
      %p75 = por %p73, %p74
      %s77 = sadd.s32 %s76, 1
      %p80 = scmp.eq.s32.totalorder %s21, 1
      %p81 = scmp.ne.s32.totalorder %s76, %s78
      %p82 = scmp.eq.s32.totalorder %s21, 0
      %p83 = por %p81, %p82
      %p84 = scmp.ne.s32.totalorder %s76, %s78
      %p85 = scmp.eq.s32.totalorder %s26, 1
      %p86 = por %p84, %p85
      %p87 = scmp.ne.s32.totalorder %s78, %s79
      %p88 = scmp.eq.s32.totalorder %s26, 0
      %p89 = por %p87, %p88
      %p90 = scmp.ne.s32.totalorder %s78, %s79
      %p91 = scmp.eq.s32.totalorder %s27, 1
      %p92 = por %p90, %p91
      %p94 = scmp.ne.s32.totalorder %s79, %s93
      %p95 = scmp.eq.s32.totalorder %s27, 0
      %p96 = por %p94, %p95
      %s98 = sadd.s32 %s97, 1
      %p101 = scmp.eq.s32.totalorder %s21, 1
      %p102 = scmp.ne.s32.totalorder %s97, %s99
      %p103 = scmp.eq.s32.totalorder %s21, 0
      %p104 = por %p102, %p103
      %p105 = scmp.ne.s32.totalorder %s97, %s99
      %p106 = scmp.eq.s32.totalorder %s26, 1
      %p107 = por %p105, %p106
      %p108 = scmp.ne.s32.totalorder %s99, %s100
      %p109 = scmp.eq.s32.totalorder %s26, 0
      %p110 = por %p108, %p109
      %p111 = scmp.ne.s32.totalorder %s99, %s100
      %p112 = scmp.eq.s32.totalorder %s27, 1
      %p113 = por %p111, %p112
      %p115 = scmp.ne.s32.totalorder %s100, %s114
      %p116 = scmp.eq.s32.totalorder %s27, 0
      %p117 = por %p115, %p116
      %s119 = sadd.s32 %s118, 1
      %p122 = scmp.eq.s32.totalorder %s21, 1
      %p123 = scmp.ne.s32.totalorder %s118, %s120
      %p124 = scmp.eq.s32.totalorder %s21, 0
      %p125 = por %p123, %p124
      %p126 = scmp.ne.s32.totalorder %s118, %s120
      %p127 = scmp.eq.s32.totalorder %s26, 1
      %p128 = por %p126, %p127
      %p129 = scmp.ne.s32.totalorder %s120, %s121
      %p130 = scmp.eq.s32.totalorder %s26, 0
      %p131 = por %p129, %p130
      %p132 = scmp.ne.s32.totalorder %s120, %s121
      %p133 = scmp.eq.s32.totalorder %s27, 1
      %p134 = por %p132, %p133
      %p136 = scmp.ne.s32.totalorder %s121, %s135
      %p137 = scmp.eq.s32.totalorder %s27, 0
      %p138 = por %p136, %p137
      %s140 = sadd.s32 %s139, 1
      %p143 = scmp.eq.s32.totalorder %s21, 1
      %p144 = scmp.ne.s32.totalorder %s139, %s141
      %p145 = scmp.eq.s32.totalorder %s21, 0
      %p146 = por %p144, %p145
      %p147 = scmp.ne.s32.totalorder %s139, %s141
      %p148 = scmp.eq.s32.totalorder %s26, 1
      %p149 = por %p147, %p148
      %p150 = scmp.ne.s32.totalorder %s141, %s142
      %p151 = scmp.eq.s32.totalorder %s26, 0
      %p152 = por %p150, %p151
      %p153 = scmp.ne.s32.totalorder %s141, %s142
      %p154 = scmp.eq.s32.totalorder %s27, 1
      %p155 = por %p153, %p154
      %p157 = scmp.ne.s32.totalorder %s142, %s156
      %p158 = scmp.eq.s32.totalorder %s27, 0
      %p159 = por %p157, %p158
      %s161 = sadd.s32 %s160, 1
      %p164 = scmp.eq.s32.totalorder %s21, 1
      %p165 = scmp.ne.s32.totalorder %s160, %s162
      %p166 = scmp.eq.s32.totalorder %s21, 0
      %p167 = por %p165, %p166
      %p168 = scmp.ne.s32.totalorder %s160, %s162
      %p169 = scmp.eq.s32.totalorder %s26, 1
      %p170 = por %p168, %p169
      %p171 = scmp.ne.s32.totalorder %s162, %s163
      %p172 = scmp.eq.s32.totalorder %s26, 0
      %p173 = por %p171, %p172
      %p174 = scmp.ne.s32.totalorder %s162, %s163
      %p175 = scmp.eq.s32.totalorder %s27, 1
      %p176 = por %p174, %p175
      %p178 = scmp.ne.s32.totalorder %s163, %s177
      %p179 = scmp.eq.s32.totalorder %s27, 0
      %p180 = por %p178, %p179
      %s182 = sadd.s32 %s181, 1
      %p185 = scmp.eq.s32.totalorder %s21, 1
      %p186 = scmp.ne.s32.totalorder %s181, %s183
      %p187 = scmp.eq.s32.totalorder %s21, 0
      %p188 = por %p186, %p187
      %p189 = scmp.ne.s32.totalorder %s181, %s183
      %p190 = scmp.eq.s32.totalorder %s26, 1
      %p191 = por %p189, %p190
      %p192 = scmp.ne.s32.totalorder %s183, %s184
      %p193 = scmp.eq.s32.totalorder %s26, 0
      %p194 = por %p192, %p193
      %p195 = scmp.ne.s32.totalorder %s183, %s184
      %p196 = scmp.eq.s32.totalorder %s27, 1
      %p197 = por %p195, %p196
      %p199 = scmp.ne.s32.totalorder %s184, %s198
      %p200 = scmp.eq.s32.totalorder %s27, 0
      %p201 = por %p199, %p200
      %s203 = sadd.s32 %s202, 1
      %p206 = scmp.eq.s32.totalorder %s21, 1
      %p207 = scmp.ne.s32.totalorder %s202, %s204
      %p208 = scmp.eq.s32.totalorder %s21, 0
      %p209 = por %p207, %p208
      %p210 = scmp.ne.s32.totalorder %s202, %s204
      %p211 = scmp.eq.s32.totalorder %s26, 1
      %p212 = por %p210, %p211
      %p213 = scmp.ne.s32.totalorder %s204, %s205
      %p214 = scmp.eq.s32.totalorder %s26, 0
      %p215 = por %p213, %p214
      %p216 = scmp.ne.s32.totalorder %s204, %s205
      %p217 = scmp.eq.s32.totalorder %s27, 1
      %p218 = por %p216, %p217
      %p220 = scmp.ne.s32.totalorder %s205, %s219
      %p221 = scmp.eq.s32.totalorder %s27, 0
      %p222 = por %p220, %p221
      %s224 = sadd.s32 %s223, 1
      %p227 = scmp.eq.s32.totalorder %s21, 1
      %p228 = scmp.ne.s32.totalorder %s223, %s225
      %p229 = scmp.eq.s32.totalorder %s21, 0
      %p230 = por %p228, %p229
      %p231 = scmp.ne.s32.totalorder %s223, %s225
      %p232 = scmp.eq.s32.totalorder %s26, 1
      %p233 = por %p231, %p232
      %p234 = scmp.ne.s32.totalorder %s225, %s226
      %p235 = scmp.eq.s32.totalorder %s26, 0
      %p236 = por %p234, %p235
      %p237 = scmp.ne.s32.totalorder %s225, %s226
      %p238 = scmp.eq.s32.totalorder %s27, 1
      %p239 = por %p237, %p238
      %p241 = scmp.ne.s32.totalorder %s226, %s240
      %p242 = scmp.eq.s32.totalorder %s27, 0
      %p243 = por %p241, %p242
      %s245 = sadd.s32 %s244, 1
      %p248 = scmp.eq.s32.totalorder %s21, 1
      %p249 = scmp.ne.s32.totalorder %s244, %s246
      %p250 = scmp.eq.s32.totalorder %s21, 0
      %p251 = por %p249, %p250
      %p252 = scmp.ne.s32.totalorder %s244, %s246
      %p253 = scmp.eq.s32.totalorder %s26, 1
      %p254 = por %p252, %p253
      %p255 = scmp.ne.s32.totalorder %s246, %s247
      %p256 = scmp.eq.s32.totalorder %s26, 0
      %p257 = por %p255, %p256
      %p258 = scmp.ne.s32.totalorder %s246, %s247
      %p259 = scmp.eq.s32.totalorder %s27, 1
      %p260 = por %p258, %p259
      %p262 = scmp.ne.s32.totalorder %s247, %s261
      %p263 = scmp.eq.s32.totalorder %s27, 0
      %p264 = por %p262, %p263
      %s266 = sadd.s32 %s265, 1
      %p269 = scmp.eq.s32.totalorder %s21, 1
      %p270 = scmp.ne.s32.totalorder %s265, %s267
      %p271 = scmp.eq.s32.totalorder %s21, 0
      %p272 = por %p270, %p271
      %p273 = scmp.ne.s32.totalorder %s265, %s267
      %p274 = scmp.eq.s32.totalorder %s26, 1
      %p275 = por %p273, %p274
      %p276 = scmp.ne.s32.totalorder %s267, %s268
      %p277 = scmp.eq.s32.totalorder %s26, 0
      %p278 = por %p276, %p277
      %p279 = scmp.ne.s32.totalorder %s267, %s268
      %p280 = scmp.eq.s32.totalorder %s27, 1
      %p281 = por %p279, %p280
      %p283 = scmp.ne.s32.totalorder %s268, %s282
      %p284 = scmp.eq.s32.totalorder %s27, 0
      %p285 = por %p283, %p284
      %s286 = ssub.s32 %s21, %s28
      %p287 = scmp.eq.s32.totalorder %s286, 0
      %s289 = sadd.s32 %s288, 1
      %s290 = scalar_select %p287, %s288, %s289
      %p293 = pneg %p287
      %p294 = scmp.eq.s32.totalorder %s21, 1
      %p295 = por %p293, %p294
      %p296 = scmp.ne.s32.totalorder %s288, %s291
      %p297 = scmp.eq.s32.totalorder %s21, 0
      %p298 = por %p296, %p297
      %p299 = scmp.ne.s32.totalorder %s288, %s291
      %p300 = scmp.eq.s32.totalorder %s26, 1
      %p301 = por %p299, %p300
      %p302 = scmp.ne.s32.totalorder %s291, %s292
      %p303 = scmp.eq.s32.totalorder %s26, 0
      %p304 = por %p302, %p303
      %p305 = scmp.ne.s32.totalorder %s291, %s292
      %p306 = scmp.eq.s32.totalorder %s27, 1
      %p307 = por %p305, %p306
      %p309 = scmp.ne.s32.totalorder %s292, %s308
      %p310 = scmp.eq.s32.totalorder %s27, 0
      %p311 = por %p309, %p310
      %p312 = scmp.le.s32.totalorder 1, %s21
      %p313 = scmp.lt.s32.totalorder %s21, 3
      %p314 = pnand %p312, %p313
      %p315 = pneg %p314
      // Predicated region
      $region9: #{tpu_custom_call.1} parent=5 // pred_check
        _
      $region10: #{tpu_custom_call.1} parent=5 // pred_check_branch
        %317 = sbr.rel (%p314) target = $region12
      $region11: #{tpu_custom_call.1} parent=5 // pred_region
        %s318 = ssub.s32 %s21, 1
        // Predicated region
        $region13: #{tpu_custom_call.1} parent=11 // pred_check
          %p319 = pneg %p68
        $region14: #{tpu_custom_call.1} parent=11 // pred_check_branch
          %321 = sbr.rel (%p319) target = $region16
        $region15: #{tpu_custom_call.1} parent=11 // pred_region
          _
        $region16: #{tpu_custom_call.1} parent=11 // pred_fallthru
          _
        // Predicated region
        $region17: #{tpu_custom_call.1} parent=11 // pred_check
          %p322 = pneg %p89
        $region18: #{tpu_custom_call.1} parent=11 // pred_check_branch
          %324 = sbr.rel (%p322) target = $region20
        $region19: #{tpu_custom_call.1} parent=11 // pred_region
          _
        $region20: #{tpu_custom_call.1} parent=11 // pred_fallthru
          _
        // Predicated region
        $region21: #{tpu_custom_call.1} parent=11 // pred_check
          %p325 = pneg %p110
        $region22: #{tpu_custom_call.1} parent=11 // pred_check_branch
          %327 = sbr.rel (%p325) target = $region24
        $region23: #{tpu_custom_call.1} parent=11 // pred_region
          _
        $region24: #{tpu_custom_call.1} parent=11 // pred_fallthru
          _
        // Predicated region
        $region25: #{tpu_custom_call.1} parent=11 // pred_check
          %p328 = pneg %p131
        $region26: #{tpu_custom_call.1} parent=11 // pred_check_branch
          %330 = sbr.rel (%p328) target = $region28
        $region27: #{tpu_custom_call.1} parent=11 // pred_region
          _
        $region28: #{tpu_custom_call.1} parent=11 // pred_fallthru
          _
        // Predicated region
        $region29: #{tpu_custom_call.1} parent=11 // pred_check
          %p331 = pneg %p152
        $region30: #{tpu_custom_call.1} parent=11 // pred_check_branch
          %333 = sbr.rel (%p331) target = $region32
        $region31: #{tpu_custom_call.1} parent=11 // pred_region
          _
        $region32: #{tpu_custom_call.1} parent=11 // pred_fallthru
          _
        // Predicated region
        $region33: #{tpu_custom_call.1} parent=11 // pred_check
          %p334 = pneg %p173
        $region34: #{tpu_custom_call.1} parent=11 // pred_check_branch
          %336 = sbr.rel (%p334) target = $region36
        $region35: #{tpu_custom_call.1} parent=11 // pred_region
          _
        $region36: #{tpu_custom_call.1} parent=11 // pred_fallthru
          _
        // Predicated region
        $region37: #{tpu_custom_call.1} parent=11 // pred_check
          %p337 = pneg %p194
        $region38: #{tpu_custom_call.1} parent=11 // pred_check_branch
          %339 = sbr.rel (%p337) target = $region40
        $region39: #{tpu_custom_call.1} parent=11 // pred_region
          _
        $region40: #{tpu_custom_call.1} parent=11 // pred_fallthru
          _
        // Predicated region
        $region41: #{tpu_custom_call.1} parent=11 // pred_check
          %p340 = pneg %p215
        $region42: #{tpu_custom_call.1} parent=11 // pred_check_branch
          %342 = sbr.rel (%p340) target = $region44
        $region43: #{tpu_custom_call.1} parent=11 // pred_region
          _
        $region44: #{tpu_custom_call.1} parent=11 // pred_fallthru
          _
        // Predicated region
        $region45: #{tpu_custom_call.1} parent=11 // pred_check
          %p343 = pneg %p236
        $region46: #{tpu_custom_call.1} parent=11 // pred_check_branch
          %345 = sbr.rel (%p343) target = $region48
        $region47: #{tpu_custom_call.1} parent=11 // pred_region
          _
        $region48: #{tpu_custom_call.1} parent=11 // pred_fallthru
          _
        // Predicated region
        $region49: #{tpu_custom_call.1} parent=11 // pred_check
          %p346 = pneg %p257
        $region50: #{tpu_custom_call.1} parent=11 // pred_check_branch
          %348 = sbr.rel (%p346) target = $region52
        $region51: #{tpu_custom_call.1} parent=11 // pred_region
          _
        $region52: #{tpu_custom_call.1} parent=11 // pred_fallthru
          _
        // Predicated region
        $region53: #{tpu_custom_call.1} parent=11 // pred_check
          %p349 = pneg %p278
        $region54: #{tpu_custom_call.1} parent=11 // pred_check_branch
          %351 = sbr.rel (%p349) target = $region56
        $region55: #{tpu_custom_call.1} parent=11 // pred_region
          _
        $region56: #{tpu_custom_call.1} parent=11 // pred_fallthru
          _
      $region12: #{tpu_custom_call.1} parent=5 // pred_fallthru
        _
      %p352 = scmp.lt.s32.totalorder %s21, 2
      // Predicated region
      $region57: #{tpu_custom_call.1} parent=5 // pred_check
        %p353 = pneg %p352
      $region58: #{tpu_custom_call.1} parent=5 // pred_check_branch
        %355 = sbr.rel (%p353) target = $region60
      $region59: #{tpu_custom_call.1} parent=5 // pred_region
        // Predicated region
        $region61: #{tpu_custom_call.1} parent=59 // pred_check
          %p356 = pneg %p41
        $region62: #{tpu_custom_call.1} parent=59 // pred_check_branch
          %358 = sbr.rel (%p356) target = $region64
        $region63: #{tpu_custom_call.1} parent=59 // pred_region
          %p359 = scmp.lt.s32.totalorder %s21, 1
          %s360 = scalar_select %p359, %s21, 1
          %s361 = smul.addr %s360, 8
          %s362 = scalar_lea.vmem %s0, %s361
        $region64: #{tpu_custom_call.1} parent=59 // pred_fallthru
          _
      $region60: #{tpu_custom_call.1} parent=5 // pred_fallthru
        _
      %p363 = scmp.le.s32.totalorder 1, %s21
      %p364 = scmp.lt.s32.totalorder %s21, 3
      %p365 = pnand %p363, %p364
      %p366 = pneg %p365
      // Predicated region
      $region65: #{tpu_custom_call.1} parent=5 // pred_check
        _
      $region66: #{tpu_custom_call.1} parent=5 // pred_check_branch
        %368 = sbr.rel (%p365) target = $region68
      $region67: #{tpu_custom_call.1} parent=5 // pred_region
        %s369 = ssub.s32 %s21, 1
        %p370 = scmp.lt.s32.totalorder %s26, 1
        %s371 = scalar_select %p370, %s26, 1
        %s372 = smul.addr %s371, 8
        %s373 = scalar_lea.vmem %s0, %s372
        %p374 = pneg %p47
        %p375 = pneg %p44
        %p376 = pneg %p68
        %p377 = pneg %p65
        %p378 = pneg %p89
        %p379 = pneg %p86
        %p380 = pneg %p110
        %p381 = pneg %p107
        %p382 = pneg %p131
        %p383 = pneg %p128
        %p384 = pneg %p152
        %p385 = pneg %p149
        %p386 = pneg %p173
        %p387 = pneg %p170
        %p388 = pneg %p194
        %p389 = pneg %p191
        %p390 = pneg %p215
        %p391 = pneg %p212
        %p392 = pneg %p236
        %p393 = pneg %p233
        %p394 = pneg %p257
        %p395 = pneg %p254
        %p396 = pneg %p278
        %p397 = pneg %p275
        %p398 = pneg %p304
        %p399 = pneg %p301
        %s400 = sand.u32 %s291, 1
        %s401 = scalar_lea.sflag [#allocation4], %s400
        %s402 = sand.u32 %s291, 1
        %s403 = smul.addr %s402, 8
        %s404 = scalar_lea.vmem [#allocation3], %s403
        %p405 = scmp.lt.s32.totalorder %s26, 1
        %s406 = scalar_select %p405, %s26, 1
        %s407 = smul.addr %s406, 8
        %s408 = scalar_lea.vmem %s0, %s407
        %v410 = vld [vmem:[%s408] sm:$0xff]
        %v411 = vld [vmem:[%s1] sm:$0x1]
        %v412 = vld [vmem:[%s2] sm:$0x1]
        %vm413 = vcmask 261120
        %v414 = vsel %vm413, %v410, 0.0
        %415 = vadd.xlane.f32.xlu0 %v414
        %v416 = vpop.xlane.xlu0 %415
        %v417 = vrcp.pop 32.0
        %v418 = vmul.f32 %v416, %v417
        %v419 = vmul.f32 %v410, %v410
        %v420 = vsel %vm413, %v419, 0.0
        %421 = vadd.xlane.f32.xlu0 %v420
        %v422 = vpop.xlane.xlu0 %421
        %v423 = vmul.f32 %v422, %v417
        %v424 = vmul.f32 %v418, %v418
        %v425 = vsub.f32 %v423, %v424
        %v426 = vsub.f32 %v410, %v418
        %v427 = vadd.f32 %v425, 1e-05
        %v428 = vrsqrt.pop %v427
        %v429 = vmul.f32 %v426, %v428
        %v431 = vlaneseq
        %v432 = vshrl.u32 %v431, 7
        %v433 = vsub.s32 0, %v432
        %v434 = vrot.slane %v411, %v433
        %v436 = vmul.f32 %v429, %v434
        %v438 = vlaneseq
        %v439 = vshrl.u32 %v438, 7
        %v440 = vsub.s32 0, %v439
        %v441 = vrot.slane %v412, %v440
        %v443 = vadd.f32 %v436, %v441
        %v444 = vpack.c.bf16 %v443, %v443
        %v445 = vld [vmem:[%s3] sm:$0xf]
        %v446 = vld [vmem:[%s3 + $0x4] sm:$0xf]
        %v447 = vld [vmem:[%s3 + $0x8] sm:$0xf]
        %v448 = vld [vmem:[%s3 + $0xc] sm:$0xf]
        %v453 = vunpack.c.l.b16 %v445
        %v454 = vunpack.c.l.b16 %v446
        %v455 = vunpack.c.l.b16 %v447
        %v456 = vunpack.c.l.b16 %v448
        %v457 = vpack.c.b16 %v454, %v453
        %v458 = vpack.c.b16 %v456, %v455
        %v462 = vsel %vm413, %v444, 0
        %464 = vmatprep.subr.bf16.mxu0 0
        %465 = vmatpush1.bf16.msra.mxu0 0
        %466 = vmatprep.subr.bf16.mxu0 0
        %467 = vmatpush1.bf16.msra.mxu0 0
        %468 = vmatprep.subr.bf16.mxu0 0
        %469 = vmatpush1.bf16.msra.mxu0 0
        %470 = vmatprep.subr.bf16.mxu0 0
        %471 = vmatpush1.bf16.msra.mxu0 0
        %472 = vmatprep.subr.bf16.mxu0 0
        %473 = vmatpush1.bf16.msra.mxu0 0
        %474 = vmatprep.subr.bf16.mxu0 0
        %475 = vmatpush1.bf16.msra.mxu0 0
        %476 = vmatprep.subr.bf16.mxu0 0
        %477 = vmatpush1.bf16.msra.mxu0 %v458
        %478 = vmatprep.subr.bf16.mxu0 0
        %479 = vmatpush1.bf16.msra.mxu0 %v457
        %480 = vmatprep.subr.bf16.mxu0 0
        %481 = vmatpush2.bf16.msra.mxu0 0
        %482 = vmatprep.subr.bf16.mxu0 0
        %483 = vmatpush2.bf16.msra.mxu0 0
        %484 = vmatprep.subr.bf16.mxu0 0
        %485 = vmatpush2.bf16.msra.mxu0 0
        %486 = vmatprep.subr.bf16.mxu0 0
        %487 = vmatpush2.bf16.msra.mxu0 0
        %488 = vmatprep.subr.bf16.mxu0 0
        %489 = vmatpush2.bf16.msra.mxu0 0
        %490 = vmatprep.subr.bf16.mxu0 0
        %491 = vmatpush2.bf16.msra.mxu0 0
        %492 = vmatprep.subr.bf16.mxu0 0
        %493 = vmatpush2.bf16.msra.mxu0 0
        %494 = vmatprep.subr.bf16.mxu0 0
        %495 = vmatpush2.bf16.msra.mxu0 0
        %496 = vmatprep.mubr.bf16.mxu0 0
        %497 = vmatmul.mubr.bf16.gmra.mxu0 %v462
        %v498 = vpop.f32.mrf.mxu0
        %v499 = vadd.f32 0.0, %v498
        %v500 = vpop.f32.mrf.mxu0
        %v501 = vpop.f32.mrf.mxu0
        %v502 = vpop.f32.mrf.mxu0
        %503 = vdwg.mxu0
        %v504 = vpack.c.bf16 %v499, %v499
        %506 = vrot.lane.b32.xlu0 %v504, 96
        %v507 = vpop.permute.xlu0 %506
        %vm508 = vcmask 64512
        %v510 = vsel %vm508, %v504, 0
        %v513 = vsel %vm508, %v507, 0
        %515 = vmatprep.subr.bf16.mxu0 0
        %516 = vmatpush1.bf16.xpose.msra.mxu0 0
        %517 = vmatprep.subr.bf16.mxu0 0
        %518 = vmatpush1.bf16.xpose.msra.mxu0 0
        %519 = vmatprep.subr.bf16.mxu0 0
        %520 = vmatpush1.bf16.xpose.msra.mxu0 0
        %521 = vmatprep.subr.bf16.mxu0 0
        %522 = vmatpush1.bf16.xpose.msra.mxu0 0
        %523 = vmatprep.subr.bf16.mxu0 0
        %524 = vmatpush1.bf16.xpose.msra.mxu0 0
        %525 = vmatprep.subr.bf16.mxu0 0
        %526 = vmatpush1.bf16.xpose.msra.mxu0 0
        %527 = vmatprep.subr.bf16.mxu0 0
        %528 = vmatpush1.bf16.xpose.msra.mxu0 0
        %529 = vmatprep.subr.bf16.mxu0 0
        %530 = vmatpush1.bf16.xpose.msra.mxu0 %v513
        %531 = vmatprep.subr.bf16.mxu0 0
        %532 = vmatpush2.bf16.xpose.msra.mxu0 0
        %533 = vmatprep.subr.bf16.mxu0 0
        %534 = vmatpush2.bf16.xpose.msra.mxu0 0
        %535 = vmatprep.subr.bf16.mxu0 0
        %536 = vmatpush2.bf16.xpose.msra.mxu0 0
        %537 = vmatprep.subr.bf16.mxu0 0
        %538 = vmatpush2.bf16.xpose.msra.mxu0 0
        %539 = vmatprep.subr.bf16.mxu0 0
        %540 = vmatpush2.bf16.xpose.msra.mxu0 0
        %541 = vmatprep.subr.bf16.mxu0 0
        %542 = vmatpush2.bf16.xpose.msra.mxu0 0
        %543 = vmatprep.subr.bf16.mxu0 0
        %544 = vmatpush2.bf16.xpose.msra.mxu0 0
        %545 = vmatprep.subr.bf16.mxu0 0
        %546 = vmatpush2.bf16.xpose.msra.mxu0 0
        %547 = vmatprep.mubr.bf16.mxu0 0
        %548 = vmatmul.mubr.bf16.gmra.mxu0 %v510
        %v549 = vpop.f32.mrf.mxu0
        %v550 = vadd.f32 0.0, %v549
        %v551 = vpop.f32.mrf.mxu0
        %v552 = vpop.f32.mrf.mxu0
        %v553 = vpop.f32.mrf.mxu0
        %554 = vdwg.mxu0
        %v555 = vsel %vm508, %v550, -inf
        %556 = vmax.xlane.f32.xlu0 %v555
        %v557 = vpop.xlane.xlu0 %556
        %v558 = vsub.f32 %v550, %v557
        %v559 = vmul.f32 %v558, 1.442695
        %v560 = vpow.pop %v559
        %v561 = vsel %vm508, %v560, 0.0
        %562 = vadd.xlane.f32.xlu0 %v561
        %v563 = vpop.xlane.xlu0 %562
        %v564 = vrcp.pop %v563
        %v565 = vmul.f32 %v560, %v564
        %v566 = vpack.c.bf16 %v565, %v565
        %567 = vrot.lane.b32.xlu0 %v504, 64
        %v568 = vpop.permute.xlu0 %567
        %v570 = vsel %vm508, %v566, 0
        %vm572 = vcmask 1043456
        %v574 = vsel %vm572, %v568, 0
        %576 = vmatprep.subr.bf16.mxu0 0
        %577 = vmatpush1.bf16.msra.mxu0 0
        %578 = vmatprep.subr.bf16.mxu0 0
        %579 = vmatpush1.bf16.msra.mxu0 0
        %580 = vmatprep.subr.bf16.mxu0 0
        %581 = vmatpush1.bf16.msra.mxu0 0
        %582 = vmatprep.subr.bf16.mxu0 0
        %583 = vmatpush1.bf16.msra.mxu0 0
        %584 = vmatprep.subr.bf16.mxu0 0
        %585 = vmatpush1.bf16.msra.mxu0 0
        %586 = vmatprep.subr.bf16.mxu0 0
        %587 = vmatpush1.bf16.msra.mxu0 0
        %588 = vmatprep.subr.bf16.mxu0 0
        %589 = vmatpush1.bf16.msra.mxu0 0
        %590 = vmatprep.subr.bf16.mxu0 0
        %591 = vmatpush1.bf16.msra.mxu0 %v574
        %592 = vmatprep.subr.bf16.mxu0 0
        %593 = vmatpush2.bf16.msra.mxu0 0
        %594 = vmatprep.subr.bf16.mxu0 0
        %595 = vmatpush2.bf16.msra.mxu0 0
        %596 = vmatprep.subr.bf16.mxu0 0
        %597 = vmatpush2.bf16.msra.mxu0 0
        %598 = vmatprep.subr.bf16.mxu0 0
        %599 = vmatpush2.bf16.msra.mxu0 0
        %600 = vmatprep.subr.bf16.mxu0 0
        %601 = vmatpush2.bf16.msra.mxu0 0
        %602 = vmatprep.subr.bf16.mxu0 0
        %603 = vmatpush2.bf16.msra.mxu0 0
        %604 = vmatprep.subr.bf16.mxu0 0
        %605 = vmatpush2.bf16.msra.mxu0 0
        %606 = vmatprep.subr.bf16.mxu0 0
        %607 = vmatpush2.bf16.msra.mxu0 0
        %608 = vmatprep.mubr.bf16.mxu0 0
        %609 = vmatmul.mubr.bf16.gmra.mxu0 %v570
        %v610 = vpop.f32.mrf.mxu0
        %v611 = vadd.f32 0.0, %v610
        %v612 = vpop.f32.mrf.mxu0
        %v613 = vpop.f32.mrf.mxu0
        %v614 = vpop.f32.mrf.mxu0
        %615 = vdwg.mxu0
        %v616 = vpack.c.bf16 %v611, %v611
        %vm617 = vcmask 60416
        %618 = vst.msk [vmem:[#allocation2] sm:$0xf] %vm617, %v616
        %619 = vrot.lane.b32.xlu0 %v504, 120
        %v620 = vpop.permute.xlu0 %619
        %621 = vrot.lane.b32.xlu0 %v504, 88
        %v622 = vpop.permute.xlu0 %621
        %v624 = vsel %vm508, %v620, 0
        %v627 = vsel %vm508, %v622, 0
        %629 = vmatprep.subr.bf16.mxu0 0
        %630 = vmatpush1.bf16.xpose.msra.mxu0 0
        %631 = vmatprep.subr.bf16.mxu0 0
        %632 = vmatpush1.bf16.xpose.msra.mxu0 0
        %633 = vmatprep.subr.bf16.mxu0 0
        %634 = vmatpush1.bf16.xpose.msra.mxu0 0
        %635 = vmatprep.subr.bf16.mxu0 0
        %636 = vmatpush1.bf16.xpose.msra.mxu0 0
        %637 = vmatprep.subr.bf16.mxu0 0
        %638 = vmatpush1.bf16.xpose.msra.mxu0 0
        %639 = vmatprep.subr.bf16.mxu0 0
        %640 = vmatpush1.bf16.xpose.msra.mxu0 0
        %641 = vmatprep.subr.bf16.mxu0 0
        %642 = vmatpush1.bf16.xpose.msra.mxu0 0
        %643 = vmatprep.subr.bf16.mxu0 0
        %644 = vmatpush1.bf16.xpose.msra.mxu0 %v627
        %645 = vmatprep.subr.bf16.mxu0 0
        %646 = vmatpush2.bf16.xpose.msra.mxu0 0
        %647 = vmatprep.subr.bf16.mxu0 0
        %648 = vmatpush2.bf16.xpose.msra.mxu0 0
        %649 = vmatprep.subr.bf16.mxu0 0
        %650 = vmatpush2.bf16.xpose.msra.mxu0 0
        %651 = vmatprep.subr.bf16.mxu0 0
        %652 = vmatpush2.bf16.xpose.msra.mxu0 0
        %653 = vmatprep.subr.bf16.mxu0 0
        %654 = vmatpush2.bf16.xpose.msra.mxu0 0
        %655 = vmatprep.subr.bf16.mxu0 0
        %656 = vmatpush2.bf16.xpose.msra.mxu0 0
        %657 = vmatprep.subr.bf16.mxu0 0
        %658 = vmatpush2.bf16.xpose.msra.mxu0 0
        %659 = vmatprep.subr.bf16.mxu0 0
        %660 = vmatpush2.bf16.xpose.msra.mxu0 0
        %661 = vmatprep.mubr.bf16.mxu0 0
        %662 = vmatmul.mubr.bf16.gmra.mxu0 %v624
        %v663 = vpop.f32.mrf.mxu0
        %v664 = vadd.f32 0.0, %v663
        %v665 = vpop.f32.mrf.mxu0
        %v666 = vpop.f32.mrf.mxu0
        %v667 = vpop.f32.mrf.mxu0
        %668 = vdwg.mxu0
        %v669 = vsel %vm508, %v664, -inf
        %670 = vmax.xlane.f32.xlu0 %v669
        %v671 = vpop.xlane.xlu0 %670
        %v672 = vsub.f32 %v664, %v671
        %v673 = vmul.f32 %v672, 1.442695
        %v674 = vpow.pop %v673
        %v675 = vsel %vm508, %v674, 0.0
        %676 = vadd.xlane.f32.xlu0 %v675
        %v677 = vpop.xlane.xlu0 %676
        %v678 = vrcp.pop %v677
        %v679 = vmul.f32 %v674, %v678
        %v680 = vpack.c.bf16 %v679, %v679
        %681 = vrot.lane.b32.xlu0 %v504, 56
        %v682 = vpop.permute.xlu0 %681
        %v684 = vsel %vm508, %v680, 0
        %v687 = vsel %vm572, %v682, 0
        %689 = vmatprep.subr.bf16.mxu0 0
        %690 = vmatpush1.bf16.msra.mxu0 0
        %691 = vmatprep.subr.bf16.mxu0 0
        %692 = vmatpush1.bf16.msra.mxu0 0
        %693 = vmatprep.subr.bf16.mxu0 0
        %694 = vmatpush1.bf16.msra.mxu0 0
        %695 = vmatprep.subr.bf16.mxu0 0
        %696 = vmatpush1.bf16.msra.mxu0 0
        %697 = vmatprep.subr.bf16.mxu0 0
        %698 = vmatpush1.bf16.msra.mxu0 0
        %699 = vmatprep.subr.bf16.mxu0 0
        %700 = vmatpush1.bf16.msra.mxu0 0
        %701 = vmatprep.subr.bf16.mxu0 0
        %702 = vmatpush1.bf16.msra.mxu0 0
        %703 = vmatprep.subr.bf16.mxu0 0
        %704 = vmatpush1.bf16.msra.mxu0 %v687
        %705 = vmatprep.subr.bf16.mxu0 0
        %706 = vmatpush2.bf16.msra.mxu0 0
        %707 = vmatprep.subr.bf16.mxu0 0
        %708 = vmatpush2.bf16.msra.mxu0 0
        %709 = vmatprep.subr.bf16.mxu0 0
        %710 = vmatpush2.bf16.msra.mxu0 0
        %711 = vmatprep.subr.bf16.mxu0 0
        %712 = vmatpush2.bf16.msra.mxu0 0
        %713 = vmatprep.subr.bf16.mxu0 0
        %714 = vmatpush2.bf16.msra.mxu0 0
        %715 = vmatprep.subr.bf16.mxu0 0
        %716 = vmatpush2.bf16.msra.mxu0 0
        %717 = vmatprep.subr.bf16.mxu0 0
        %718 = vmatpush2.bf16.msra.mxu0 0
        %719 = vmatprep.subr.bf16.mxu0 0
        %720 = vmatpush2.bf16.msra.mxu0 0
        %721 = vmatprep.mubr.bf16.mxu0 0
        %722 = vmatmul.mubr.bf16.gmra.mxu0 %v684
        %v723 = vpop.f32.mrf.mxu0
        %v724 = vadd.f32 0.0, %v723
        %v725 = vpop.f32.mrf.mxu0
        %v726 = vpop.f32.mrf.mxu0
        %v727 = vpop.f32.mrf.mxu0
        %728 = vdwg.mxu0
        %v729 = vpack.c.bf16 %v724, %v724
        %v731 = vunpack.c.l.b16 %v729
        %v732 = vpack.c.b16 %v731, %v731
        %733 = vrot.lane.b32.xlu0 %v732, 8
        %v734 = vpop.permute.xlu0 %733
        %vm736 = vcmask 126016
        %737 = vst.msk [vmem:[#allocation2] sm:$0xf] %vm736, %v734
        %738 = vrot.lane.b32.xlu0 %v504, 112
        %v739 = vpop.permute.xlu0 %738
        %740 = vrot.lane.b32.xlu0 %v504, 80
        %v741 = vpop.permute.xlu0 %740
        %v743 = vsel %vm508, %v739, 0
        %v746 = vsel %vm508, %v741, 0
        %748 = vmatprep.subr.bf16.mxu0 0
        %749 = vmatpush1.bf16.xpose.msra.mxu0 0
        %750 = vmatprep.subr.bf16.mxu0 0
        %751 = vmatpush1.bf16.xpose.msra.mxu0 0
        %752 = vmatprep.subr.bf16.mxu0 0
        %753 = vmatpush1.bf16.xpose.msra.mxu0 0
        %754 = vmatprep.subr.bf16.mxu0 0
        %755 = vmatpush1.bf16.xpose.msra.mxu0 0
        %756 = vmatprep.subr.bf16.mxu0 0
        %757 = vmatpush1.bf16.xpose.msra.mxu0 0
        %758 = vmatprep.subr.bf16.mxu0 0
        %759 = vmatpush1.bf16.xpose.msra.mxu0 0
        %760 = vmatprep.subr.bf16.mxu0 0
        %761 = vmatpush1.bf16.xpose.msra.mxu0 0
        %762 = vmatprep.subr.bf16.mxu0 0
        %763 = vmatpush1.bf16.xpose.msra.mxu0 %v746
        %764 = vmatprep.subr.bf16.mxu0 0
        %765 = vmatpush2.bf16.xpose.msra.mxu0 0
        %766 = vmatprep.subr.bf16.mxu0 0
        %767 = vmatpush2.bf16.xpose.msra.mxu0 0
        %768 = vmatprep.subr.bf16.mxu0 0
        %769 = vmatpush2.bf16.xpose.msra.mxu0 0
        %770 = vmatprep.subr.bf16.mxu0 0
        %771 = vmatpush2.bf16.xpose.msra.mxu0 0
        %772 = vmatprep.subr.bf16.mxu0 0
        %773 = vmatpush2.bf16.xpose.msra.mxu0 0
        %774 = vmatprep.subr.bf16.mxu0 0
        %775 = vmatpush2.bf16.xpose.msra.mxu0 0
        %776 = vmatprep.subr.bf16.mxu0 0
        %777 = vmatpush2.bf16.xpose.msra.mxu0 0
        %778 = vmatprep.subr.bf16.mxu0 0
        %779 = vmatpush2.bf16.xpose.msra.mxu0 0
        %780 = vmatprep.mubr.bf16.mxu0 0
        %781 = vmatmul.mubr.bf16.gmra.mxu0 %v743
        %v782 = vpop.f32.mrf.mxu0
        %v783 = vadd.f32 0.0, %v782
        %v784 = vpop.f32.mrf.mxu0
        %v785 = vpop.f32.mrf.mxu0
        %v786 = vpop.f32.mrf.mxu0
        %787 = vdwg.mxu0
        %v788 = vsel %vm508, %v783, -inf
        %789 = vmax.xlane.f32.xlu0 %v788
        %v790 = vpop.xlane.xlu0 %789
        %v791 = vsub.f32 %v783, %v790
        %v792 = vmul.f32 %v791, 1.442695
        %v793 = vpow.pop %v792
        %v794 = vsel %vm508, %v793, 0.0
        %795 = vadd.xlane.f32.xlu0 %v794
        %v796 = vpop.xlane.xlu0 %795
        %v797 = vrcp.pop %v796
        %v798 = vmul.f32 %v793, %v797
        %v799 = vpack.c.bf16 %v798, %v798
        %800 = vrot.lane.b32.xlu0 %v504, 48
        %v801 = vpop.permute.xlu0 %800
        %v803 = vsel %vm508, %v799, 0
        %v806 = vsel %vm572, %v801, 0
        %808 = vmatprep.subr.bf16.mxu0 0
        %809 = vmatpush1.bf16.msra.mxu0 0
        %810 = vmatprep.subr.bf16.mxu0 0
        %811 = vmatpush1.bf16.msra.mxu0 0
        %812 = vmatprep.subr.bf16.mxu0 0
        %813 = vmatpush1.bf16.msra.mxu0 0
        %814 = vmatprep.subr.bf16.mxu0 0
        %815 = vmatpush1.bf16.msra.mxu0 0
        %816 = vmatprep.subr.bf16.mxu0 0
        %817 = vmatpush1.bf16.msra.mxu0 0
        %818 = vmatprep.subr.bf16.mxu0 0
        %819 = vmatpush1.bf16.msra.mxu0 0
        %820 = vmatprep.subr.bf16.mxu0 0
        %821 = vmatpush1.bf16.msra.mxu0 0
        %822 = vmatprep.subr.bf16.mxu0 0
        %823 = vmatpush1.bf16.msra.mxu0 %v806
        %824 = vmatprep.subr.bf16.mxu0 0
        %825 = vmatpush2.bf16.msra.mxu0 0
        %826 = vmatprep.subr.bf16.mxu0 0
        %827 = vmatpush2.bf16.msra.mxu0 0
        %828 = vmatprep.subr.bf16.mxu0 0
        %829 = vmatpush2.bf16.msra.mxu0 0
        %830 = vmatprep.subr.bf16.mxu0 0
        %831 = vmatpush2.bf16.msra.mxu0 0
        %832 = vmatprep.subr.bf16.mxu0 0
        %833 = vmatpush2.bf16.msra.mxu0 0
        %834 = vmatprep.subr.bf16.mxu0 0
        %835 = vmatpush2.bf16.msra.mxu0 0
        %836 = vmatprep.subr.bf16.mxu0 0
        %837 = vmatpush2.bf16.msra.mxu0 0
        %838 = vmatprep.subr.bf16.mxu0 0
        %839 = vmatpush2.bf16.msra.mxu0 0
        %840 = vmatprep.mubr.bf16.mxu0 0
        %841 = vmatmul.mubr.bf16.gmra.mxu0 %v803
        %v842 = vpop.f32.mrf.mxu0
        %v843 = vadd.f32 0.0, %v842
        %v844 = vpop.f32.mrf.mxu0
        %v845 = vpop.f32.mrf.mxu0
        %v846 = vpop.f32.mrf.mxu0
        %847 = vdwg.mxu0
        %v848 = vpack.c.bf16 %v843, %v843
        %v850 = vunpack.c.l.b16 %v848
        %v851 = vpack.c.b16 %v850, %v850
        %852 = vrot.lane.b32.xlu0 %v851, 16
        %v853 = vpop.permute.xlu0 %852
        %vm855 = vcmask 191616
        %856 = vst.msk [vmem:[#allocation2] sm:$0xf] %vm855, %v853
        %857 = vrot.lane.b32.xlu0 %v504, 104
        %v858 = vpop.permute.xlu0 %857
        %859 = vrot.lane.b32.xlu0 %v504, 72
        %v860 = vpop.permute.xlu0 %859
        %v862 = vsel %vm508, %v858, 0
        %v865 = vsel %vm508, %v860, 0
        %867 = vmatprep.subr.bf16.mxu0 0
        %868 = vmatpush1.bf16.xpose.msra.mxu0 0
        %869 = vmatprep.subr.bf16.mxu0 0
        %870 = vmatpush1.bf16.xpose.msra.mxu0 0
        %871 = vmatprep.subr.bf16.mxu0 0
        %872 = vmatpush1.bf16.xpose.msra.mxu0 0
        %873 = vmatprep.subr.bf16.mxu0 0
        %874 = vmatpush1.bf16.xpose.msra.mxu0 0
        %875 = vmatprep.subr.bf16.mxu0 0
        %876 = vmatpush1.bf16.xpose.msra.mxu0 0
        %877 = vmatprep.subr.bf16.mxu0 0
        %878 = vmatpush1.bf16.xpose.msra.mxu0 0
        %879 = vmatprep.subr.bf16.mxu0 0
        %880 = vmatpush1.bf16.xpose.msra.mxu0 0
        %881 = vmatprep.subr.bf16.mxu0 0
        %882 = vmatpush1.bf16.xpose.msra.mxu0 %v865
        %883 = vmatprep.subr.bf16.mxu0 0
        %884 = vmatpush2.bf16.xpose.msra.mxu0 0
        %885 = vmatprep.subr.bf16.mxu0 0
        %886 = vmatpush2.bf16.xpose.msra.mxu0 0
        %887 = vmatprep.subr.bf16.mxu0 0
        %888 = vmatpush2.bf16.xpose.msra.mxu0 0
        %889 = vmatprep.subr.bf16.mxu0 0
        %890 = vmatpush2.bf16.xpose.msra.mxu0 0
        %891 = vmatprep.subr.bf16.mxu0 0
        %892 = vmatpush2.bf16.xpose.msra.mxu0 0
        %893 = vmatprep.subr.bf16.mxu0 0
        %894 = vmatpush2.bf16.xpose.msra.mxu0 0
        %895 = vmatprep.subr.bf16.mxu0 0
        %896 = vmatpush2.bf16.xpose.msra.mxu0 0
        %897 = vmatprep.subr.bf16.mxu0 0
        %898 = vmatpush2.bf16.xpose.msra.mxu0 0
        %899 = vmatprep.mubr.bf16.mxu0 0
        %900 = vmatmul.mubr.bf16.gmra.mxu0 %v862
        %v901 = vpop.f32.mrf.mxu0
        %v902 = vadd.f32 0.0, %v901
        %v903 = vpop.f32.mrf.mxu0
        %v904 = vpop.f32.mrf.mxu0
        %v905 = vpop.f32.mrf.mxu0
        %906 = vdwg.mxu0
        %v907 = vsel %vm508, %v902, -inf
        %908 = vmax.xlane.f32.xlu0 %v907
        %v909 = vpop.xlane.xlu0 %908
        %v910 = vsub.f32 %v902, %v909
        %v911 = vmul.f32 %v910, 1.442695
        %v912 = vpow.pop %v911
        %v913 = vsel %vm508, %v912, 0.0
        %914 = vadd.xlane.f32.xlu0 %v913
        %v915 = vpop.xlane.xlu0 %914
        %v916 = vrcp.pop %v915
        %v917 = vmul.f32 %v912, %v916
        %v918 = vpack.c.bf16 %v917, %v917
        %919 = vrot.lane.b32.xlu0 %v504, 40
        %v920 = vpop.permute.xlu0 %919
        %v922 = vsel %vm508, %v918, 0
        %v925 = vsel %vm572, %v920, 0
        %927 = vmatprep.subr.bf16.mxu0 0
        %928 = vmatpush1.bf16.msra.mxu0 0
        %929 = vmatprep.subr.bf16.mxu0 0
        %930 = vmatpush1.bf16.msra.mxu0 0
        %931 = vmatprep.subr.bf16.mxu0 0
        %932 = vmatpush1.bf16.msra.mxu0 0
        %933 = vmatprep.subr.bf16.mxu0 0
        %934 = vmatpush1.bf16.msra.mxu0 0
        %935 = vmatprep.subr.bf16.mxu0 0
        %936 = vmatpush1.bf16.msra.mxu0 0
        %937 = vmatprep.subr.bf16.mxu0 0
        %938 = vmatpush1.bf16.msra.mxu0 0
        %939 = vmatprep.subr.bf16.mxu0 0
        %940 = vmatpush1.bf16.msra.mxu0 0
        %941 = vmatprep.subr.bf16.mxu0 0
        %942 = vmatpush1.bf16.msra.mxu0 %v925
        %943 = vmatprep.subr.bf16.mxu0 0
        %944 = vmatpush2.bf16.msra.mxu0 0
        %945 = vmatprep.subr.bf16.mxu0 0
        %946 = vmatpush2.bf16.msra.mxu0 0
        %947 = vmatprep.subr.bf16.mxu0 0
        %948 = vmatpush2.bf16.msra.mxu0 0
        %949 = vmatprep.subr.bf16.mxu0 0
        %950 = vmatpush2.bf16.msra.mxu0 0
        %951 = vmatprep.subr.bf16.mxu0 0
        %952 = vmatpush2.bf16.msra.mxu0 0
        %953 = vmatprep.subr.bf16.mxu0 0
        %954 = vmatpush2.bf16.msra.mxu0 0
        %955 = vmatprep.subr.bf16.mxu0 0
        %956 = vmatpush2.bf16.msra.mxu0 0
        %957 = vmatprep.subr.bf16.mxu0 0
        %958 = vmatpush2.bf16.msra.mxu0 0
        %959 = vmatprep.mubr.bf16.mxu0 0
        %960 = vmatmul.mubr.bf16.gmra.mxu0 %v922
        %v961 = vpop.f32.mrf.mxu0
        %v962 = vadd.f32 0.0, %v961
        %v963 = vpop.f32.mrf.mxu0
        %v964 = vpop.f32.mrf.mxu0
        %v965 = vpop.f32.mrf.mxu0
        %966 = vdwg.mxu0
        %v967 = vpack.c.bf16 %v962, %v962
        %v969 = vunpack.c.l.b16 %v967
        %v970 = vpack.c.b16 %v969, %v969
        %971 = vrot.lane.b32.xlu0 %v970, 24
        %v972 = vpop.permute.xlu0 %971
        %vm974 = vcmask 257216
        %975 = vst.msk [vmem:[#allocation2] sm:$0xf] %vm974, %v972
        %v976 = vld [vmem:[#allocation2] sm:$0xf]
        %v977 = vld [vmem:[%s4] sm:$0xf]
        %v978 = vld [vmem:[%s4 + $0x4] sm:$0xf]
        %v979 = vld [vmem:[%s4 + $0x8] sm:$0xf]
        %v980 = vld [vmem:[%s4 + $0xc] sm:$0xf]
        %v985 = vunpack.c.l.b16 %v977
        %v986 = vunpack.c.l.b16 %v978
        %v987 = vunpack.c.l.b16 %v979
        %v988 = vunpack.c.l.b16 %v980
        %v989 = vpack.c.b16 %v986, %v985
        %v990 = vpack.c.b16 %v988, %v987
        %v994 = vsel %vm413, %v976, 0
        %996 = vmatprep.subr.bf16.mxu0 0
        %997 = vmatpush1.bf16.msra.mxu0 0
        %998 = vmatprep.subr.bf16.mxu0 0
        %999 = vmatpush1.bf16.msra.mxu0 0
        %1000 = vmatprep.subr.bf16.mxu0 0
        %1001 = vmatpush1.bf16.msra.mxu0 0
        %1002 = vmatprep.subr.bf16.mxu0 0
        %1003 = vmatpush1.bf16.msra.mxu0 0
        %1004 = vmatprep.subr.bf16.mxu0 0
        %1005 = vmatpush1.bf16.msra.mxu0 0
        %1006 = vmatprep.subr.bf16.mxu0 0
        %1007 = vmatpush1.bf16.msra.mxu0 0
        %1008 = vmatprep.subr.bf16.mxu0 0
        %1009 = vmatpush1.bf16.msra.mxu0 %v990
        %1010 = vmatprep.subr.bf16.mxu0 0
        %1011 = vmatpush1.bf16.msra.mxu0 %v989
        %1012 = vmatprep.subr.bf16.mxu0 0
        %1013 = vmatpush2.bf16.msra.mxu0 0
        %1014 = vmatprep.subr.bf16.mxu0 0
        %1015 = vmatpush2.bf16.msra.mxu0 0
        %1016 = vmatprep.subr.bf16.mxu0 0
        %1017 = vmatpush2.bf16.msra.mxu0 0
        %1018 = vmatprep.subr.bf16.mxu0 0
        %1019 = vmatpush2.bf16.msra.mxu0 0
        %1020 = vmatprep.subr.bf16.mxu0 0
        %1021 = vmatpush2.bf16.msra.mxu0 0
        %1022 = vmatprep.subr.bf16.mxu0 0
        %1023 = vmatpush2.bf16.msra.mxu0 0
        %1024 = vmatprep.subr.bf16.mxu0 0
        %1025 = vmatpush2.bf16.msra.mxu0 0
        %1026 = vmatprep.subr.bf16.mxu0 0
        %1027 = vmatpush2.bf16.msra.mxu0 0
        %1028 = vmatprep.mubr.bf16.mxu0 0
        %1029 = vmatmul.mubr.bf16.gmra.mxu0 %v994
        %v1030 = vpop.f32.mrf.mxu0
        %v1031 = vadd.f32 0.0, %v1030
        %v1032 = vpop.f32.mrf.mxu0
        %v1033 = vpop.f32.mrf.mxu0
        %v1034 = vpop.f32.mrf.mxu0
        %1035 = vdwg.mxu0
        %v1036 = vadd.f32 %v410, %v1031
        %v1037 = vld [vmem:[%s5] sm:$0x1]
        %v1039 = vlaneseq
        %v1040 = vshrl.u32 %v1039, 7
        %v1041 = vsub.s32 0, %v1040
        %v1042 = vrot.slane %v1037, %v1041
        %v1044 = vadd.f32 %v1036, %v1042
        %v1045 = vld [vmem:[%s6] sm:$0x1]
        %v1046 = vld [vmem:[%s7] sm:$0x1]
        %v1047 = vsel %vm413, %v1044, 0.0
        %1048 = vadd.xlane.f32.xlu0 %v1047
        %v1049 = vpop.xlane.xlu0 %1048
        %v1050 = vmul.f32 %v1049, %v417
        %v1051 = vmul.f32 %v1044, %v1044
        %v1052 = vsel %vm413, %v1051, 0.0
        %1053 = vadd.xlane.f32.xlu0 %v1052
        %v1054 = vpop.xlane.xlu0 %1053
        %v1055 = vmul.f32 %v1054, %v417
        %v1056 = vmul.f32 %v1050, %v1050
        %v1057 = vsub.f32 %v1055, %v1056
        %v1058 = vsub.f32 %v1044, %v1050
        %v1059 = vadd.f32 %v1057, 1e-05
        %v1060 = vrsqrt.pop %v1059
        %v1061 = vmul.f32 %v1058, %v1060
        %v1063 = vlaneseq
        %v1064 = vshrl.u32 %v1063, 7
        %v1065 = vsub.s32 0, %v1064
        %v1066 = vrot.slane %v1045, %v1065
        %v1068 = vmul.f32 %v1061, %v1066
        %v1070 = vlaneseq
        %v1071 = vshrl.u32 %v1070, 7
        %v1072 = vsub.s32 0, %v1071
        %v1073 = vrot.slane %v1046, %v1072
        %v1075 = vadd.f32 %v1068, %v1073
        %v1076 = vpack.c.bf16 %v1075, %v1075
        %v1077 = vld [vmem:[%s8] sm:$0xf]
        %v1078 = vld [vmem:[%s8 + $0x4] sm:$0xf]
        %v1079 = vld [vmem:[%s8 + $0x8] sm:$0xf]
        %v1080 = vld [vmem:[%s8 + $0xc] sm:$0xf]
        %v1081 = vld [vmem:[%s9] sm:$0x1]
        %v1083 = vlaneseq
        %v1084 = vshrl.u32 %v1083, 7
        %v1085 = vsub.s32 0, %v1084
        %v1086 = vrot.slane %v1081, %v1085
        %v1092 = vunpack.c.l.b16 %v1077
        %v1093 = vunpack.c.l.b16 %v1078
        %v1094 = vunpack.c.l.b16 %v1079
        %v1095 = vunpack.c.l.b16 %v1080
        %v1096 = vpack.c.b16 %v1093, %v1092
        %v1097 = vpack.c.b16 %v1095, %v1094
        %v1101 = vsel %vm413, %v1076, 0
        %1103 = vmatprep.subr.bf16.mxu0 0
        %1104 = vmatpush1.bf16.msra.mxu0 0
        %1105 = vmatprep.subr.bf16.mxu0 0
        %1106 = vmatpush1.bf16.msra.mxu0 0
        %1107 = vmatprep.subr.bf16.mxu0 0
        %1108 = vmatpush1.bf16.msra.mxu0 0
        %1109 = vmatprep.subr.bf16.mxu0 0
        %1110 = vmatpush1.bf16.msra.mxu0 0
        %1111 = vmatprep.subr.bf16.mxu0 0
        %1112 = vmatpush1.bf16.msra.mxu0 0
        %1113 = vmatprep.subr.bf16.mxu0 0
        %1114 = vmatpush1.bf16.msra.mxu0 0
        %1115 = vmatprep.subr.bf16.mxu0 0
        %1116 = vmatpush1.bf16.msra.mxu0 %v1097
        %1117 = vmatprep.subr.bf16.mxu0 0
        %1118 = vmatpush1.bf16.msra.mxu0 %v1096
        %1119 = vmatprep.subr.bf16.mxu0 0
        %1120 = vmatpush2.bf16.msra.mxu0 0
        %1121 = vmatprep.subr.bf16.mxu0 0
        %1122 = vmatpush2.bf16.msra.mxu0 0
        %1123 = vmatprep.subr.bf16.mxu0 0
        %1124 = vmatpush2.bf16.msra.mxu0 0
        %1125 = vmatprep.subr.bf16.mxu0 0
        %1126 = vmatpush2.bf16.msra.mxu0 0
        %1127 = vmatprep.subr.bf16.mxu0 0
        %1128 = vmatpush2.bf16.msra.mxu0 0
        %1129 = vmatprep.subr.bf16.mxu0 0
        %1130 = vmatpush2.bf16.msra.mxu0 0
        %1131 = vmatprep.subr.bf16.mxu0 0
        %1132 = vmatpush2.bf16.msra.mxu0 0
        %1133 = vmatprep.subr.bf16.mxu0 0
        %1134 = vmatpush2.bf16.msra.mxu0 0
        %1135 = vmatprep.mubr.bf16.mxu0 0
        %1136 = vmatmul.mubr.bf16.gmra.mxu0 %v1101
        %v1137 = vpop.f32.mrf.mxu0
        %v1138 = vadd.f32 %v1086, %v1137
        %v1139 = vpop.f32.mrf.mxu0
        %v1140 = vpop.f32.mrf.mxu0
        %v1141 = vpop.f32.mrf.mxu0
        %1142 = vdwg.mxu0
        %v1143 = vmul.f32 %v1138, 0.5
        %v1144 = vmul.f32 %v1138, 0.70710677
        %v1145 = verf.f32.pop %v1144
        %v1146 = vadd.f32 %v1145, 1.0
        %v1147 = vmul.f32 %v1143, %v1146
        %v1148 = vpack.c.bf16 %v1147, %v1147
        %v1149 = vld [vmem:[%s10] sm:$0xf]
        %v1150 = vld [vmem:[%s10 + $0x4] sm:$0xf]
        %v1151 = vld [vmem:[%s10 + $0x8] sm:$0xf]
        %v1152 = vld [vmem:[%s10 + $0xc] sm:$0xf]
        %v1153 = vld [vmem:[%s10 + $0x10] sm:$0xf]
        %v1154 = vld [vmem:[%s10 + $0x14] sm:$0xf]
        %v1155 = vld [vmem:[%s10 + $0x18] sm:$0xf]
        %v1156 = vld [vmem:[%s10 + $0x1c] sm:$0xf]
        %v1157 = vld [vmem:[%s10 + $0x20] sm:$0xf]
        %v1158 = vld [vmem:[%s10 + $0x24] sm:$0xf]
        %v1159 = vld [vmem:[%s10 + $0x28] sm:$0xf]
        %v1160 = vld [vmem:[%s10 + $0x2c] sm:$0xf]
        %v1161 = vld [vmem:[%s10 + $0x30] sm:$0xf]
        %v1162 = vld [vmem:[%s10 + $0x34] sm:$0xf]
        %v1163 = vld [vmem:[%s10 + $0x38] sm:$0xf]
        %v1164 = vld [vmem:[%s10 + $0x3c] sm:$0xf]
        %v1181 = vunpack.c.l.b16 %v1149
        %v1182 = vunpack.c.l.b16 %v1150
        %v1183 = vunpack.c.l.b16 %v1151
        %v1184 = vunpack.c.l.b16 %v1152
        %v1185 = vunpack.c.l.b16 %v1153
        %v1186 = vunpack.c.l.b16 %v1154
        %v1187 = vunpack.c.l.b16 %v1155
        %v1188 = vunpack.c.l.b16 %v1156
        %v1189 = vunpack.c.l.b16 %v1157
        %v1190 = vunpack.c.l.b16 %v1158
        %v1191 = vunpack.c.l.b16 %v1159
        %v1192 = vunpack.c.l.b16 %v1160
        %v1193 = vunpack.c.l.b16 %v1161
        %v1194 = vunpack.c.l.b16 %v1162
        %v1195 = vunpack.c.l.b16 %v1163
        %v1196 = vunpack.c.l.b16 %v1164
        %v1197 = vpack.c.b16 %v1182, %v1181
        %v1198 = vpack.c.b16 %v1184, %v1183
        %v1199 = vpack.c.b16 %v1186, %v1185
        %v1200 = vpack.c.b16 %v1188, %v1187
        %v1201 = vpack.c.b16 %v1190, %v1189
        %v1202 = vpack.c.b16 %v1192, %v1191
        %v1203 = vpack.c.b16 %v1194, %v1193
        %v1204 = vpack.c.b16 %v1196, %v1195
        %1213 = vmatprep.subr.bf16.mxu0 0
        %1214 = vmatpush1.bf16.msra.mxu0 %v1204
        %1215 = vmatprep.subr.bf16.mxu0 0
        %1216 = vmatpush1.bf16.msra.mxu0 %v1203
        %1217 = vmatprep.subr.bf16.mxu0 0
        %1218 = vmatpush1.bf16.msra.mxu0 %v1202
        %1219 = vmatprep.subr.bf16.mxu0 0
        %1220 = vmatpush1.bf16.msra.mxu0 %v1201
        %1221 = vmatprep.subr.bf16.mxu0 0
        %1222 = vmatpush1.bf16.msra.mxu0 %v1200
        %1223 = vmatprep.subr.bf16.mxu0 0
        %1224 = vmatpush1.bf16.msra.mxu0 %v1199
        %1225 = vmatprep.subr.bf16.mxu0 0
        %1226 = vmatpush1.bf16.msra.mxu0 %v1198
        %1227 = vmatprep.subr.bf16.mxu0 0
        %1228 = vmatpush1.bf16.msra.mxu0 %v1197
        %1229 = vmatprep.subr.bf16.mxu0 0
        %1230 = vmatpush2.bf16.msra.mxu0 0
        %1231 = vmatprep.subr.bf16.mxu0 0
        %1232 = vmatpush2.bf16.msra.mxu0 0
        %1233 = vmatprep.subr.bf16.mxu0 0
        %1234 = vmatpush2.bf16.msra.mxu0 0
        %1235 = vmatprep.subr.bf16.mxu0 0
        %1236 = vmatpush2.bf16.msra.mxu0 0
        %1237 = vmatprep.subr.bf16.mxu0 0
        %1238 = vmatpush2.bf16.msra.mxu0 0
        %1239 = vmatprep.subr.bf16.mxu0 0
        %1240 = vmatpush2.bf16.msra.mxu0 0
        %1241 = vmatprep.subr.bf16.mxu0 0
        %1242 = vmatpush2.bf16.msra.mxu0 0
        %1243 = vmatprep.subr.bf16.mxu0 0
        %1244 = vmatpush2.bf16.msra.mxu0 0
        %1245 = vmatprep.mubr.bf16.mxu0 0
        %1246 = vmatmul.mubr.bf16.gmra.mxu0 %v1148
        %v1247 = vpop.f32.mrf.mxu0
        %v1248 = vadd.f32 0.0, %v1247
        %v1249 = vpop.f32.mrf.mxu0
        %v1250 = vpop.f32.mrf.mxu0
        %v1251 = vpop.f32.mrf.mxu0
        %1252 = vdwg.mxu0
        %v1253 = vadd.f32 %v1044, %v1248
        %v1254 = vld [vmem:[%s11] sm:$0x1]
        %v1256 = vlaneseq
        %v1257 = vshrl.u32 %v1256, 7
        %v1258 = vsub.s32 0, %v1257
        %v1259 = vrot.slane %v1254, %v1258
        %v1261 = vadd.f32 %v1253, %v1259
        %1262 = vst.msk [vmem:[%s404] sm:$0xff] %vm413, %v1261
        %s1263 = sand.u32 %s291, 1
        %s1264 = scalar_lea.sflag [#allocation4], %s1263
        %s1265 = sand.u32 %s291, 1
        %s1266 = smul.addr %s1265, 8
        %s1267 = scalar_lea.vmem [#allocation3], %s1266
        // Predicated region
        $region69: #{tpu_custom_call.1} parent=67 // pred_check
          %p1268 = pneg %p301
        $region70: #{tpu_custom_call.1} parent=67 // pred_check_branch
          %1270 = sbr.rel (%p1268) target = $region72
        $region71: #{tpu_custom_call.1} parent=67 // pred_region
          %s1272 = ssub.s32 128, 128
          %1273 = vsyncadd %s1264, %s1272
          %s1274 = smul.addr %s26, 128
          %s1275 = scalar_lea.hbm %s12, %s1274
          %s1277 = sshll.u32 %s1267, 4
          %s1278 = int_to_ptr.vmem [resolvable:$true] %s1277
          %1280 = dma.vmem_to_hbm [thread:$0]  %s1278, 128, %s1275, %s1264
        $region72: #{tpu_custom_call.1} parent=67 // pred_fallthru
          _
      $region68: #{tpu_custom_call.1} parent=5 // pred_fallthru
        _
      %p1281 = scmp.le.s32.totalorder 2, %s21
      // Predicated region
      $region73: #{tpu_custom_call.1} parent=5 // pred_check
        %p1282 = pneg %p1281
      $region74: #{tpu_custom_call.1} parent=5 // pred_check_branch
        %1284 = sbr.rel (%p1282) target = $region76
      $region75: #{tpu_custom_call.1} parent=5 // pred_region
        %s1285 = ssub.s32 %s21, 2
        // Predicated region
        $region77: #{tpu_custom_call.1} parent=75 // pred_check
          %p1286 = pneg %p307
        $region78: #{tpu_custom_call.1} parent=75 // pred_check_branch
          %1288 = sbr.rel (%p1286) target = $region80
        $region79: #{tpu_custom_call.1} parent=75 // pred_region
          %s1289 = sand.u32 %s292, 1
          %s1290 = scalar_lea.sflag [#allocation4], %s1289
          %s1291 = sand.u32 %s292, 1
          %s1292 = smul.addr %s1291, 8
          %s1293 = scalar_lea.vmem [#allocation3], %s1292
          %1294 = dma.done %s1290, 128
        $region80: #{tpu_custom_call.1} parent=75 // pred_fallthru
          _
      $region76: #{tpu_custom_call.1} parent=5 // pred_fallthru
        _
    $region6: #{tpu_custom_call.1} parent=1 // loop_footer
      %s25 = sadd.s32 1, %s21
    $region7: #{tpu_custom_call.1} parent=1 // loop_footer_branch
      %20 = sbr.rel target = $region3
    $region8: #{tpu_custom_call.1} parent=1 // loop_exit
      _
    %1295 = vsyncpa [#allocation4], 1
    %s1296 = scalar_lea.sflag [#allocation4], 1
    %1297 = vsyncpa %s1296, 1

</llo_original>
